<compile_context>
chip_gen: v6e
topology: v6e:2x2x1
jax: 0.10.0
libtpu: 0.0.40
codegen_flags: <defaults>
</compile_context>

<pallas_src>
import functools
import numpy as np
import jax
import jax.numpy as jnp
from jax.experimental import pallas as pl
from jax.experimental.pallas import tpu as pltpu

MAX_ROW_TILE = 4096   # sweepable 2048-8192; ~208 KiB per double-buffered block here
ROW_MULT = 16         # bf16 sublane packing -> row tiles are multiples of 16


# ---------------------------------------------------------------- kernels ---
def _make_split_mlp_kernel(n_in):
    """ReLU MLP whose first weight matrix is row-split across n_in operands.

    h = relu(sum_k x_k @ w1_k + b1);  o = h @ w2 + b2
    Mathematically equal to concat(x_k, -1) @ vstack(w1_k) but without ever
    materializing the concatenation in HBM.  Matmuls run in the operand dtype
    (bf16 by default) with f32 MXU accumulation; the elementwise epilogue is f32.
    """
    def kernel(*refs):
        x_refs = refs[:n_in]
        w1_refs = refs[n_in:2 * n_in]
        b1_ref, w2_ref, b2_ref, o_ref = refs[2 * n_in:]
        h = jnp.dot(x_refs[0][...], w1_refs[0][...],
                    preferred_element_type=jnp.float32)
        for xr, wr in zip(x_refs[1:], w1_refs[1:]):
            h = h + jnp.dot(xr[...], wr[...], preferred_element_type=jnp.float32)
        h = jnp.maximum(h + b1_ref[...].astype(jnp.float32), 0.0)
        o = jnp.dot(h.astype(w2_ref.dtype), w2_ref[...],
                    preferred_element_type=jnp.float32)
        o = o + b2_ref[...].astype(jnp.float32)
        # TODO(synk): dout=16 -> lane-sparse masked stores (vst.msk); only relayout
        # to a lane-dense (tile/8, 128) slab if a bundle dump shows vst binding.
        o_ref[...] = o.astype(o_ref.dtype)
    return kernel


def _row_tile(rows, max_tile):
    """Row tile: multiple of 16, >= 2 grid steps whenever possible so v7x's two
    TensorCores both get work; capped at max_tile; full extent for tiny inputs.
    Rows are independent, so Pallas masks the ragged last block's stores."""
    if rows <= ROW_MULT:
        return rows
    half = pl.cdiv(rows, 2)
    tile = pl.cdiv(half, ROW_MULT) * ROW_MULT
    return min(max_tile, tile)


def pallas_split_mlp(inputs, w1_parts, b1, w2, b2, *, max_tile=MAX_ROW_TILE):
    assert len(inputs) == len(w1_parts)
    rows = inputs[0].shape[0]
    tile = _row_tile(rows, max_tile)
    hidden = w2.shape[0]
    dout = w2.shape[1]

    in_specs = [pl.BlockSpec((tile, x.shape[1]), lambda i: (i, 0)) for x in inputs]
    in_specs += [pl.BlockSpec(w.shape, lambda i: (0, 0)) for w in w1_parts]
    in_specs += [
        pl.BlockSpec(b1.shape, lambda i: (0, 0)),
        pl.BlockSpec(w2.shape, lambda i: (0, 0)),
        pl.BlockSpec(b2.shape, lambda i: (0, 0)),
    ]

    flops = 2 * rows * (sum(int(w.shape[0]) for w in w1_parts) * hidden
                        + hidden * dout)
    bytes_accessed = (
        sum(x.size * x.dtype.itemsize for x in inputs)
        + sum(w.size * w.dtype.itemsize for w in w1_parts)
        + b1.size * b1.dtype.itemsize
        + w2.size * w2.dtype.itemsize
        + b2.size * b2.dtype.itemsize
        + rows * dout * 4)

    return pl.pallas_call(
        _make_split_mlp_kernel(len(inputs)),
        out_shape=jax.ShapeDtypeStruct((rows, dout), jnp.float32),
        grid=(pl.cdiv(rows, tile),),
        in_specs=in_specs,
        out_specs=pl.BlockSpec((tile, dout), lambda i: (i, 0)),
        compiler_params=pltpu.CompilerParams(
            dimension_semantics=("parallel",)),
        cost_estimate=pl.CostEstimate(flops=flops, transcendentals=0,
                                      bytes_accessed=bytes_accessed),
    )(*inputs, *w1_parts, b1, w2, b2)


def ref_split_mlp(inputs, w1_parts, b1, w2, b2, **_):
    """Pure-XLA reference of the same numerical recipe (bf16 matmuls, f32 acc)."""
    h = jnp.dot(inputs[0], w1_parts[0], preferred_element_type=jnp.float32)
    for x, w in zip(inputs[1:], w1_parts[1:]):
        h = h + jnp.dot(x, w, preferred_element_type=jnp.float32)
    h = jnp.maximum(h + b1, 0.0)
    return jnp.dot(h.astype(w2.dtype), w2, preferred_element_type=jnp.float32) + b2


# -------------------------------------------------------------- parameters ---
def _dense(key, din, dout, dtype):
    kw, kb = jax.random.split(key)
    w = (jax.random.normal(kw, (din, dout), jnp.float32)
         / jnp.sqrt(float(din))).astype(dtype)
    b = 0.01 * jax.random.normal(kb, (1, dout), jnp.float32)   # biases stay f32
    return w, b


def init_conv_block_params(key, node_in, edge_in, edge_dims, node_dims,
                           hidden_size, dtype=jnp.bfloat16):
    k = jax.random.split(key, 5)
    # edge MLP: in = [x_dst | x_src | edge_attr]
    #   w1 for the gathered [x_dst | x_src] operand is stored pre-vstacked.
    w1ds, _ = _dense(k[0], 2 * node_in, hidden_size, dtype)
    w1e, eb1 = _dense(k[1], edge_in, hidden_size, dtype)
    ew2, eb2 = _dense(k[2], hidden_size, edge_dims, dtype)
    # node MLP: in = [x | agg]  ->  w1 stored row-split
    w1x, _ = _dense(k[3], node_in, hidden_size, dtype)
    w1a, nb1 = _dense(k[4], edge_dims, hidden_size, dtype)
    kw2 = jax.random.split(k[4])[0]
    nw2, nb2 = _dense(kw2, hidden_size, node_dims, dtype)
    return {
        "edge_mlp": {"w1_parts": (w1ds, w1e), "b1": eb1, "w2": ew2, "b2": eb2},
        "node_mlp": {"w1_parts": (w1x, w1a), "b1": nb1, "w2": nw2, "b2": nb2},
    }


def compute_deg_inv(dst, n_nodes, dtype=jnp.float32):
    """1/deg (clamped at 1) for the SmoothingLayer; hoist this out of the per-block
    forward when edge_index is shared across the FlowGNN stack."""
    ones = jnp.ones((dst.shape[0], 1), dtype)
    deg = jnp.zeros((n_nodes, 1), dtype).at[dst].add(ones)
    return 1.0 / jnp.maximum(deg, 1.0)


# ----------------------------------------------------------------- forward ---
def flowgnn_conv_block(params, node_attr, edge_index, edge_attr,
                       node_skip_cons=None, edge_skip_cons=None,
                       fc_con=None, skip_info=None, deg_inv=None,
                       *, use_pallas=True, max_tile=MAX_ROW_TILE,
                       compute_dtype=jnp.bfloat16):
    mlp = pallas_split_mlp if use_pallas else ref_split_mlp

    # ---- block-level skip adds / concats (f32, identical to the PyTorch code)
    if node_skip_cons is not None:
        node_attr = node_attr + node_skip_cons
    if edge_skip_cons is not None:
        edge_attr = edge_attr + edge_skip_cons
    if skip_info is not None:
        node_attr = jnp.concatenate([node_attr, skip_info], axis=1)
    if fc_con is not None:
        node_attr = jnp.concatenate([node_attr, fc_con], axis=1)

    src, dst = edge_index[0], edge_index[1]
    n_nodes = node_attr.shape[0]
    n_edges = src.shape[0]
    node_in = node_attr.shape[1]

    # dominant HBM streams in bf16 (halves gather / MLP-input traffic)
    x_c = node_attr.astype(compute_dtype)
    e_c = edge_attr.astype(compute_dtype)

    # ---- ProcessorLayer ------------------------------------------------
    # ONE gather over node_attr produces the concatenated [x_dst | x_src] rows:
    # interleave [dst0, src0, dst1, src1, ...] and fold pairs into the feature dim.
    ds_idx = jnp.stack([dst, src], axis=1).reshape(-1)
    x_ds = jnp.take(x_c, ds_idx, axis=0).reshape(n_edges, 2 * node_in)

    ep = params["edge_mlp"]
    updated_edges = mlp([x_ds, e_c], ep["w1_parts"],
                        ep["b1"], ep["w2"], ep["b2"], max_tile=max_tile)

    agg = jnp.zeros((n_nodes, updated_edges.shape[1]), jnp.float32
                    ).at[dst].add(updated_edges)          # XLA scatter-add (glue)

    nmp = params["node_mlp"]
    updated_nodes = mlp([x_c, agg.astype(compute_dtype)], nmp["w1_parts"],
                        nmp["b1"], nmp["w2"], nmp["b2"], max_tile=max_tile)

    # ---- SmoothingLayer (scatter_mean of x[src] over dst) ---------------
    if deg_inv is None:
        deg_inv = compute_deg_inv(dst, n_nodes, updated_nodes.dtype)
    nbr_sum = jnp.zeros_like(updated_nodes).at[dst].add(
        jnp.take(updated_nodes, src, axis=0))             # XLA scatter-add (glue)
    smoothed_nodes = nbr_sum * deg_inv                    # fuses with the scatter

    return smoothed_nodes, updated_edges


# -------------------------------------------------------------------- main ---
if __name__ == "__main__":
    # small demo shapes
    N, E = 200, 600
    node_base, skip_dim, fc_dim, edge_in = 8, 3, 2, 4
    edge_dims, node_dims, hidden_size = 16, 16, 128

    key = jax.random.PRNGKey(0)
    kx, ki, kfc, kns, ks, kd, ke, kes, kp = jax.random.split(key, 9)
    node_attr = jax.random.normal(kx, (N, node_base), jnp.float32)
    skip_info = jax.random.normal(ki, (N, skip_dim), jnp.float32)
    fc_con = jax.random.normal(kfc, (N, fc_dim), jnp.float32)
    node_skip = jax.random.normal(kns, (N, node_base), jnp.float32)
    src = jax.random.randint(ks, (E,), 0, N)
    dst = jax.random.randint(kd, (E,), 0, N)
    edge_index = jnp.stack([src, dst]).astype(jnp.int32)
    edge_attr = jax.random.normal(ke, (E, edge_in), jnp.float32)
    edge_skip = jax.random.normal(kes, (E, edge_in), jnp.float32)

    node_in = node_base + skip_dim + fc_dim  # dim seen by the conv after concats
    params = init_conv_block_params(kp, node_in=node_in, edge_in=edge_in,
                                    edge_dims=edge_dims, node_dims=node_dims,
                                    hidden_size=hidden_size, dtype=jnp.bfloat16)

    # deg_inv depends only on edge_index -> hoisted out of the block forward
    deg_inv = compute_deg_inv(edge_index[1], N)

    fwd = jax.jit(functools.partial(flowgnn_conv_block, use_pallas=True))
    ref_fwd = jax.jit(functools.partial(flowgnn_conv_block, use_pallas=False))

    out_nodes, out_edges = fwd(params, node_attr, edge_index, edge_attr,
                               node_skip, edge_skip, fc_con, skip_info,
                               deg_inv=deg_inv)
    out_nodes = jax.block_until_ready(out_nodes)
    out_edges = jax.block_until_ready(out_edges)

    ref_nodes, ref_edges = ref_fwd(params, node_attr, edge_index, edge_attr,
                                   node_skip, edge_skip, fc_con, skip_info,
                                   deg_inv=deg_inv)
    ref_nodes = jax.block_until_ready(ref_nodes)
    ref_edges = jax.block_until_ready(ref_edges)

    assert out_nodes.shape == (N, node_dims), out_nodes.shape
    assert out_edges.shape == (E, edge_dims), out_edges.shape
    # bf16 matmul inputs in BOTH paths; remaining diff is f32 accumulation order
    # (Pallas MXU vs XLA) plus rare bf16 re-rounding of h -> loose-ish tolerance.
    np.testing.assert_allclose(np.asarray(out_nodes), np.asarray(ref_nodes),
                               rtol=1e-2, atol=1e-2)
    np.testing.assert_allclose(np.asarray(out_edges), np.asarray(ref_edges),
                               rtol=1e-2, atol=1e-2)
    print("KERNEL_OK")
</pallas_src>

<mosaic_0001>
module attributes {stable_mosaic.version = 11 : i64} {
  func.func @kernel(%arg0: i32, %arg1: memref<304x26xbf16, #tpu.memory_space<vmem>>, %arg2: memref<304x4xbf16, #tpu.memory_space<vmem>>, %arg3: memref<26x128xbf16, #tpu.memory_space<vmem>>, %arg4: memref<4x128xbf16, #tpu.memory_space<vmem>>, %arg5: memref<1x128xf32, #tpu.memory_space<vmem>>, %arg6: memref<128x16xbf16, #tpu.memory_space<vmem>>, %arg7: memref<1x16xf32, #tpu.memory_space<vmem>>, %arg8: memref<304x16xf32, #tpu.memory_space<vmem>>) attributes {dimension_semantics = [#tpu.dimension_semantics<parallel>], iteration_bounds = array<i64: 2>, scalar_prefetch = 0 : i64, scratch_operands = 0 : i64, tpu.core_type = #tpu.core_type<tc>, window_params = [{transform_indices = @transform_0, window_bounds = array<i64: 304, 26>}, {transform_indices = @transform_1, window_bounds = array<i64: 304, 4>}, {pipeline_mode = #tpu.pipeline_mode<synchronous>, transform_indices = @transform_2, window_bounds = array<i64: 26, 128>}, {pipeline_mode = #tpu.pipeline_mode<synchronous>, transform_indices = @transform_3, window_bounds = array<i64: 4, 128>}, {pipeline_mode = #tpu.pipeline_mode<synchronous>, transform_indices = @transform_4, window_bounds = array<i64: 1, 128>}, {pipeline_mode = #tpu.pipeline_mode<synchronous>, transform_indices = @transform_5, window_bounds = array<i64: 128, 16>}, {pipeline_mode = #tpu.pipeline_mode<synchronous>, transform_indices = @transform_6, window_bounds = array<i64: 1, 16>}, {transform_indices = @transform_7, window_bounds = array<i64: 304, 16>}]} {
    %c0 = arith.constant 0 : index
    %c0_0 = arith.constant 0 : index
    %0 = vector.load %arg1[%c0, %c0_0] : memref<304x26xbf16, #tpu.memory_space<vmem>>, vector<304x26xbf16>
    %c0_1 = arith.constant 0 : index
    %c0_2 = arith.constant 0 : index
    %1 = vector.load %arg3[%c0_1, %c0_2] : memref<26x128xbf16, #tpu.memory_space<vmem>>, vector<26x128xbf16>
    %cst = arith.constant dense<0.000000e+00> : vector<304x128xf32>
    %2 = tpu.matmul %0, %1, %cst {dimension_numbers = #tpu.dot_dimension_numbers<[1], [0], [0], [1], [0, 0, 1, 1], [], []>} : vector<304x26xbf16>, vector<26x128xbf16>, vector<304x128xf32> -> vector<304x128xf32>
    %c0_3 = arith.constant 0 : index
    %c0_4 = arith.constant 0 : index
    %3 = vector.load %arg2[%c0_3, %c0_4] : memref<304x4xbf16, #tpu.memory_space<vmem>>, vector<304x4xbf16>
    %c0_5 = arith.constant 0 : index
    %c0_6 = arith.constant 0 : index
    %4 = vector.load %arg4[%c0_5, %c0_6] : memref<4x128xbf16, #tpu.memory_space<vmem>>, vector<4x128xbf16>
    %cst_7 = arith.constant dense<0.000000e+00> : vector<304x128xf32>
    %5 = tpu.matmul %3, %4, %cst_7 {dimension_numbers = #tpu.dot_dimension_numbers<[1], [0], [0], [1], [0, 0, 1, 1], [], []>} : vector<304x4xbf16>, vector<4x128xbf16>, vector<304x128xf32> -> vector<304x128xf32>
    %6 = arith.addf %2, %5 : vector<304x128xf32>
    %c0_8 = arith.constant 0 : index
    %c0_9 = arith.constant 0 : index
    %7 = vector.load %arg5[%c0_8, %c0_9] : memref<1x128xf32, #tpu.memory_space<vmem>>, vector<1x128xf32>
    %8 = vector.broadcast %7 : vector<1x128xf32> to vector<304x128xf32>
    %9 = arith.addf %6, %8 : vector<304x128xf32>
    %cst_10 = arith.constant 0.000000e+00 : f32
    %10 = vector.broadcast %cst_10 : f32 to vector<304x128xf32>
    %11 = arith.maximumf %9, %10 : vector<304x128xf32>
    %12 = arith.truncf %11 : vector<304x128xf32> to vector<304x128xbf16>
    %c0_11 = arith.constant 0 : index
    %c0_12 = arith.constant 0 : index
    %13 = vector.load %arg6[%c0_11, %c0_12] : memref<128x16xbf16, #tpu.memory_space<vmem>>, vector<128x16xbf16>
    %cst_13 = arith.constant dense<0.000000e+00> : vector<304x16xf32>
    %14 = tpu.matmul %12, %13, %cst_13 {dimension_numbers = #tpu.dot_dimension_numbers<[1], [0], [0], [1], [0, 0, 1, 1], [], []>} : vector<304x128xbf16>, vector<128x16xbf16>, vector<304x16xf32> -> vector<304x16xf32>
    %c0_14 = arith.constant 0 : index
    %c0_15 = arith.constant 0 : index
    %15 = vector.load %arg7[%c0_14, %c0_15] : memref<1x16xf32, #tpu.memory_space<vmem>>, vector<1x16xf32>
    %16 = vector.broadcast %15 : vector<1x16xf32> to vector<304x16xf32>
    %17 = arith.addf %14, %16 : vector<304x16xf32>
    %c0_16 = arith.constant 0 : index
    %c0_17 = arith.constant 0 : index
    %18 = vector.load %arg8[%c0_16, %c0_17] : memref<304x16xf32, #tpu.memory_space<vmem>>, vector<304x16xf32>
    tpu.vector_store %arg8[%c0_16, %c0_17], %17 {strides = array<i32>} : memref<304x16xf32, #tpu.memory_space<vmem>>, vector<304x16xf32>,
    return
  }
  func.func @transform_0(%arg0: i32) -> (i32, i32) {
    %c0_i32 = arith.constant 0 : i32
    %c0_i32_0 = arith.constant 0 : i32
    return %arg0, %c0_i32 : i32, i32
  }
  func.func @transform_1(%arg0: i32) -> (i32, i32) {
    %c0_i32 = arith.constant 0 : i32
    %c0_i32_0 = arith.constant 0 : i32
    return %arg0, %c0_i32 : i32, i32
  }
  func.func @transform_2(%arg0: i32) -> (i32, i32) {
    %c0_i32 = arith.constant 0 : i32
    %c0_i32_0 = arith.constant 0 : i32
    %c0_i32_1 = arith.constant 0 : i32
    return %c0_i32, %c0_i32_0 : i32, i32
  }
  func.func @transform_3(%arg0: i32) -> (i32, i32) {
    %c0_i32 = arith.constant 0 : i32
    %c0_i32_0 = arith.constant 0 : i32
    %c0_i32_1 = arith.constant 0 : i32
    return %c0_i32, %c0_i32_0 : i32, i32
  }
  func.func @transform_4(%arg0: i32) -> (i32, i32) {
    %c0_i32 = arith.constant 0 : i32
    %c0_i32_0 = arith.constant 0 : i32
    %c0_i32_1 = arith.constant 0 : i32
    return %c0_i32, %c0_i32_0 : i32, i32
  }
  func.func @transform_5(%arg0: i32) -> (i32, i32) {
    %c0_i32 = arith.constant 0 : i32
    %c0_i32_0 = arith.constant 0 : i32
    %c0_i32_1 = arith.constant 0 : i32
    return %c0_i32, %c0_i32_0 : i32, i32
  }
  func.func @transform_6(%arg0: i32) -> (i32, i32) {
    %c0_i32 = arith.constant 0 : i32
    %c0_i32_0 = arith.constant 0 : i32
    %c0_i32_1 = arith.constant 0 : i32
    return %c0_i32, %c0_i32_0 : i32, i32
  }
  func.func @transform_7(%arg0: i32) -> (i32, i32) {
    %c0_i32 = arith.constant 0 : i32
    %c0_i32_0 = arith.constant 0 : i32
    return %arg0, %c0_i32 : i32, i32
  }
}

module attributes {stable_mosaic.version = 11 : i64} {
  func.func @kernel(%arg0: i32, %arg1: memref<112x13xbf16, #tpu.memory_space<vmem>>, %arg2: memref<112x16xbf16, #tpu.memory_space<vmem>>, %arg3: memref<13x128xbf16, #tpu.memory_space<vmem>>, %arg4: memref<16x128xbf16, #tpu.memory_space<vmem>>, %arg5: memref<1x128xf32, #tpu.memory_space<vmem>>, %arg6: memref<128x16xbf16, #tpu.memory_space<vmem>>, %arg7: memref<1x16xf32, #tpu.memory_space<vmem>>, %arg8: memref<112x16xf32, #tpu.memory_space<vmem>>) attributes {dimension_semantics = [#tpu.dimension_semantics<parallel>], iteration_bounds = array<i64: 2>, scalar_prefetch = 0 : i64, scratch_operands = 0 : i64, tpu.core_type = #tpu.core_type<tc>, window_params = [{transform_indices = @transform_0, window_bounds = array<i64: 112, 13>}, {transform_indices = @transform_1, window_bounds = array<i64: 112, 16>}, {pipeline_mode = #tpu.pipeline_mode<synchronous>, transform_indices = @transform_2, window_bounds = array<i64: 13, 128>}, {pipeline_mode = #tpu.pipeline_mode<synchronous>, transform_indices = @transform_3, window_bounds = array<i64: 16, 128>}, {pipeline_mode = #tpu.pipeline_mode<synchronous>, transform_indices = @transform_4, window_bounds = array<i64: 1, 128>}, {pipeline_mode = #tpu.pipeline_mode<synchronous>, transform_indices = @transform_5, window_bounds = array<i64: 128, 16>}, {pipeline_mode = #tpu.pipeline_mode<synchronous>, transform_indices = @transform_6, window_bounds = array<i64: 1, 16>}, {transform_indices = @transform_7, window_bounds = array<i64: 112, 16>}]} {
    %c0 = arith.constant 0 : index
    %c0_0 = arith.constant 0 : index
    %0 = vector.load %arg1[%c0, %c0_0] : memref<112x13xbf16, #tpu.memory_space<vmem>>, vector<112x13xbf16>
    %c0_1 = arith.constant 0 : index
    %c0_2 = arith.constant 0 : index
    %1 = vector.load %arg3[%c0_1, %c0_2] : memref<13x128xbf16, #tpu.memory_space<vmem>>, vector<13x128xbf16>
    %cst = arith.constant dense<0.000000e+00> : vector<112x128xf32>
    %2 = tpu.matmul %0, %1, %cst {dimension_numbers = #tpu.dot_dimension_numbers<[1], [0], [0], [1], [0, 0, 1, 1], [], []>} : vector<112x13xbf16>, vector<13x128xbf16>, vector<112x128xf32> -> vector<112x128xf32>
    %c0_3 = arith.constant 0 : index
    %c0_4 = arith.constant 0 : index
    %3 = vector.load %arg2[%c0_3, %c0_4] : memref<112x16xbf16, #tpu.memory_space<vmem>>, vector<112x16xbf16>
    %c0_5 = arith.constant 0 : index
    %c0_6 = arith.constant 0 : index
    %4 = vector.load %arg4[%c0_5, %c0_6] : memref<16x128xbf16, #tpu.memory_space<vmem>>, vector<16x128xbf16>
    %cst_7 = arith.constant dense<0.000000e+00> : vector<112x128xf32>
    %5 = tpu.matmul %3, %4, %cst_7 {dimension_numbers = #tpu.dot_dimension_numbers<[1], [0], [0], [1], [0, 0, 1, 1], [], []>} : vector<112x16xbf16>, vector<16x128xbf16>, vector<112x128xf32> -> vector<112x128xf32>
    %6 = arith.addf %2, %5 : vector<112x128xf32>
    %c0_8 = arith.constant 0 : index
    %c0_9 = arith.constant 0 : index
    %7 = vector.load %arg5[%c0_8, %c0_9] : memref<1x128xf32, #tpu.memory_space<vmem>>, vector<1x128xf32>
    %8 = vector.broadcast %7 : vector<1x128xf32> to vector<112x128xf32>
    %9 = arith.addf %6, %8 : vector<112x128xf32>
    %cst_10 = arith.constant 0.000000e+00 : f32
    %10 = vector.broadcast %cst_10 : f32 to vector<112x128xf32>
    %11 = arith.maximumf %9, %10 : vector<112x128xf32>
    %12 = arith.truncf %11 : vector<112x128xf32> to vector<112x128xbf16>
    %c0_11 = arith.constant 0 : index
    %c0_12 = arith.constant 0 : index
    %13 = vector.load %arg6[%c0_11, %c0_12] : memref<128x16xbf16, #tpu.memory_space<vmem>>, vector<128x16xbf16>
    %cst_13 = arith.constant dense<0.000000e+00> : vector<112x16xf32>
    %14 = tpu.matmul %12, %13, %cst_13 {dimension_numbers = #tpu.dot_dimension_numbers<[1], [0], [0], [1], [0, 0, 1, 1], [], []>} : vector<112x128xbf16>, vector<128x16xbf16>, vector<112x16xf32> -> vector<112x16xf32>
    %c0_14 = arith.constant 0 : index
    %c0_15 = arith.constant 0 : index
    %15 = vector.load %arg7[%c0_14, %c0_15] : memref<1x16xf32, #tpu.memory_space<vmem>>, vector<1x16xf32>
    %16 = vector.broadcast %15 : vector<1x16xf32> to vector<112x16xf32>
    %17 = arith.addf %14, %16 : vector<112x16xf32>
    %c0_16 = arith.constant 0 : index
    %c0_17 = arith.constant 0 : index
    %18 = vector.load %arg8[%c0_16, %c0_17] : memref<112x16xf32, #tpu.memory_space<vmem>>, vector<112x16xf32>
    tpu.vector_store %arg8[%c0_16, %c0_17], %17 {strides = array<i32>} : memref<112x16xf32, #tpu.memory_space<vmem>>, vector<112x16xf32>,
    return
  }
  func.func @transform_0(%arg0: i32) -> (i32, i32) {
    %c0_i32 = arith.constant 0 : i32
    %c0_i32_0 = arith.constant 0 : i32
    return %arg0, %c0_i32 : i32, i32
  }
  func.func @transform_1(%arg0: i32) -> (i32, i32) {
    %c0_i32 = arith.constant 0 : i32
    %c0_i32_0 = arith.constant 0 : i32
    return %arg0, %c0_i32 : i32, i32
  }
  func.func @transform_2(%arg0: i32) -> (i32, i32) {
    %c0_i32 = arith.constant 0 : i32
    %c0_i32_0 = arith.constant 0 : i32
    %c0_i32_1 = arith.constant 0 : i32
    return %c0_i32, %c0_i32_0 : i32, i32
  }
  func.func @transform_3(%arg0: i32) -> (i32, i32) {
    %c0_i32 = arith.constant 0 : i32
    %c0_i32_0 = arith.constant 0 : i32
    %c0_i32_1 = arith.constant 0 : i32
    return %c0_i32, %c0_i32_0 : i32, i32
  }
  func.func @transform_4(%arg0: i32) -> (i32, i32) {
    %c0_i32 = arith.constant 0 : i32
    %c0_i32_0 = arith.constant 0 : i32
    %c0_i32_1 = arith.constant 0 : i32
    return %c0_i32, %c0_i32_0 : i32, i32
  }
  func.func @transform_5(%arg0: i32) -> (i32, i32) {
    %c0_i32 = arith.constant 0 : i32
    %c0_i32_0 = arith.constant 0 : i32
    %c0_i32_1 = arith.constant 0 : i32
    return %c0_i32, %c0_i32_0 : i32, i32
  }
  func.func @transform_6(%arg0: i32) -> (i32, i32) {
    %c0_i32 = arith.constant 0 : i32
    %c0_i32_0 = arith.constant 0 : i32
    %c0_i32_1 = arith.constant 0 : i32
    return %c0_i32, %c0_i32_0 : i32, i32
  }
  func.func @transform_7(%arg0: i32) -> (i32, i32) {
    %c0_i32 = arith.constant 0 : i32
    %c0_i32_0 = arith.constant 0 : i32
    return %arg0, %c0_i32 : i32, i32
  }
}

</mosaic_0001>

<llo_original>
// kernel: flowgnn_conv_block.3
$region0: #{flowgnn_conv_block.3}
  #allocation0 [shape = 'u32[]', space=smem, size = 0x4, offset = 0x4, fixed_abs, tag = 'smem constant byte address 0x4 - core index']
  #allocation1 [shape = 'u32[144,128]{1,0:T(1,128)}', space=vmem, size = 0x12000, scoped, tag = 'internal scratch']
  %s0 = inlined_call_operand.vmem [shape: bf16[200,13], index: 0, kind: input, shape index: {}]
  %s1 = inlined_call_operand.vmem [shape: bf16[200,16], index: 1, kind: input, shape index: {}]
  %s2 = inlined_call_operand.vmem [shape: bf16[13,128], index: 2, kind: input, shape index: {}]
  %s3 = inlined_call_operand.vmem [shape: bf16[16,128], index: 3, kind: input, shape index: {}]
  %s4 = inlined_call_operand.vmem [shape: f32[1,128], index: 4, kind: input, shape index: {}]
  %s5 = inlined_call_operand.vmem [shape: bf16[128,16], index: 5, kind: input, shape index: {}]
  %s6 = inlined_call_operand.vmem [shape: f32[1,16], index: 6, kind: input, shape index: {}]
  %s7 = inlined_call_operand.vmem [shape: f32[200,16], index: 7, kind: output, shape index: {}]
  %s8 = sld [smem:[#allocation0]]
  $region109: #{flowgnn_conv_block.3} parent=0
    _
  %s10 = ssub.s32 1, %s8
  %s11 = scalar_select 0, %s10, %s8
  $region1: #{flowgnn_conv_block.3} parent=0
    #allocation2 [shape = 'u8[114688]{0}', space=vmem, size = 0x1c000, scoped, tag = 'output window, operand 0']
    loop: start=0, step=1, limit=4
    $region2: #{flowgnn_conv_block.3} parent=1 // loop_pre_header
      _
    $region3: #{flowgnn_conv_block.3} parent=1 // loop_header
      %s13 = sphi 0, %s17
      %p14 = scmp.ge.s32.totalorder %s13, 4
      %s23 = sphi 0, %s25
      %s26 = sphi 0, %s23
      %s27 = sphi 0, %s26
      %s43 = sphi 0, %s27
      %s49 = sphi 0, %s51
      %s52 = sphi 0, %s49
      %s53 = sphi 0, %s52
      %s69 = sphi 0, %s53
      %s73 = sphi 0, %s73
      %s75 = sphi 0, %s73
      %s76 = sphi 0, %s75
      %s90 = sphi 0, %s76
      %s94 = sphi 0, %s94
      %s96 = sphi 0, %s94
      %s97 = sphi 0, %s96
      %s111 = sphi 0, %s97
      %s115 = sphi 0, %s115
      %s117 = sphi 0, %s115
      %s118 = sphi 0, %s117
      %s132 = sphi 0, %s118
      %s136 = sphi 0, %s136
      %s138 = sphi 0, %s136
      %s139 = sphi 0, %s138
      %s153 = sphi 0, %s139
      %s157 = sphi 0, %s157
      %s159 = sphi 0, %s157
      %s160 = sphi 0, %s159
      %s174 = sphi 0, %s160
      %s180 = sphi 0, %s182
      %s183 = sphi 0, %s180
      %s184 = sphi 0, %s183
      %s200 = sphi 0, %s184
    $region4: #{flowgnn_conv_block.3} parent=1 // loop_header_branch
      %16 = sbr.rel (%p14) target = $region8
    $region5: #{flowgnn_conv_block.3} parent=1 // loop_body
      %s18 = ssub.s32 %s13, 1
      %s19 = ssub.s32 %s13, 2
      %s20 = sadd.s32 %s13, 1
      %s21 = ssub.s32 %s13, %s20
      %p22 = scmp.eq.s32.totalorder %s21, 0
      %s24 = sadd.s32 %s23, 1
      %s25 = scalar_select %p22, %s23, %s24
      %p28 = pneg %p22
      %p29 = scmp.eq.s32.totalorder %s13, 1
      %p30 = por %p28, %p29
      %p31 = scmp.ne.s32.totalorder %s23, %s26
      %p32 = scmp.eq.s32.totalorder %s13, 0
      %p33 = por %p31, %p32
      %p34 = scmp.ne.s32.totalorder %s23, %s26
      %p35 = scmp.eq.s32.totalorder %s18, 1
      %p36 = por %p34, %p35
      %p37 = scmp.ne.s32.totalorder %s26, %s27
      %p38 = scmp.eq.s32.totalorder %s18, 0
      %p39 = por %p37, %p38
      %p40 = scmp.ne.s32.totalorder %s26, %s27
      %p41 = scmp.eq.s32.totalorder %s19, 1
      %p42 = por %p40, %p41
      %p44 = scmp.ne.s32.totalorder %s27, %s43
      %p45 = scmp.eq.s32.totalorder %s19, 0
      %p46 = por %p44, %p45
      %s47 = ssub.s32 %s13, %s20
      %p48 = scmp.eq.s32.totalorder %s47, 0
      %s50 = sadd.s32 %s49, 1
      %s51 = scalar_select %p48, %s49, %s50
      %p54 = pneg %p48
      %p55 = scmp.eq.s32.totalorder %s13, 1
      %p56 = por %p54, %p55
      %p57 = scmp.ne.s32.totalorder %s49, %s52
      %p58 = scmp.eq.s32.totalorder %s13, 0
      %p59 = por %p57, %p58
      %p60 = scmp.ne.s32.totalorder %s49, %s52
      %p61 = scmp.eq.s32.totalorder %s18, 1
      %p62 = por %p60, %p61
      %p63 = scmp.ne.s32.totalorder %s52, %s53
      %p64 = scmp.eq.s32.totalorder %s18, 0
      %p65 = por %p63, %p64
      %p66 = scmp.ne.s32.totalorder %s52, %s53
      %p67 = scmp.eq.s32.totalorder %s19, 1
      %p68 = por %p66, %p67
      %p70 = scmp.ne.s32.totalorder %s53, %s69
      %p71 = scmp.eq.s32.totalorder %s19, 0
      %p72 = por %p70, %p71
      %s74 = sadd.s32 %s73, 1
      %p77 = scmp.eq.s32.totalorder %s13, 1
      %p78 = scmp.ne.s32.totalorder %s73, %s75
      %p79 = scmp.eq.s32.totalorder %s13, 0
      %p80 = por %p78, %p79
      %p81 = scmp.ne.s32.totalorder %s73, %s75
      %p82 = scmp.eq.s32.totalorder %s18, 1
      %p83 = por %p81, %p82
      %p84 = scmp.ne.s32.totalorder %s75, %s76
      %p85 = scmp.eq.s32.totalorder %s18, 0
      %p86 = por %p84, %p85
      %p87 = scmp.ne.s32.totalorder %s75, %s76
      %p88 = scmp.eq.s32.totalorder %s19, 1
      %p89 = por %p87, %p88
      %p91 = scmp.ne.s32.totalorder %s76, %s90
      %p92 = scmp.eq.s32.totalorder %s19, 0
      %p93 = por %p91, %p92
      %s95 = sadd.s32 %s94, 1
      %p98 = scmp.eq.s32.totalorder %s13, 1
      %p99 = scmp.ne.s32.totalorder %s94, %s96
      %p100 = scmp.eq.s32.totalorder %s13, 0
      %p101 = por %p99, %p100
      %p102 = scmp.ne.s32.totalorder %s94, %s96
      %p103 = scmp.eq.s32.totalorder %s18, 1
      %p104 = por %p102, %p103
      %p105 = scmp.ne.s32.totalorder %s96, %s97
      %p106 = scmp.eq.s32.totalorder %s18, 0
      %p107 = por %p105, %p106
      %p108 = scmp.ne.s32.totalorder %s96, %s97
      %p109 = scmp.eq.s32.totalorder %s19, 1
      %p110 = por %p108, %p109
      %p112 = scmp.ne.s32.totalorder %s97, %s111
      %p113 = scmp.eq.s32.totalorder %s19, 0
      %p114 = por %p112, %p113
      %s116 = sadd.s32 %s115, 1
      %p119 = scmp.eq.s32.totalorder %s13, 1
      %p120 = scmp.ne.s32.totalorder %s115, %s117
      %p121 = scmp.eq.s32.totalorder %s13, 0
      %p122 = por %p120, %p121
      %p123 = scmp.ne.s32.totalorder %s115, %s117
      %p124 = scmp.eq.s32.totalorder %s18, 1
      %p125 = por %p123, %p124
      %p126 = scmp.ne.s32.totalorder %s117, %s118
      %p127 = scmp.eq.s32.totalorder %s18, 0
      %p128 = por %p126, %p127
      %p129 = scmp.ne.s32.totalorder %s117, %s118
      %p130 = scmp.eq.s32.totalorder %s19, 1
      %p131 = por %p129, %p130
      %p133 = scmp.ne.s32.totalorder %s118, %s132
      %p134 = scmp.eq.s32.totalorder %s19, 0
      %p135 = por %p133, %p134
      %s137 = sadd.s32 %s136, 1
      %p140 = scmp.eq.s32.totalorder %s13, 1
      %p141 = scmp.ne.s32.totalorder %s136, %s138
      %p142 = scmp.eq.s32.totalorder %s13, 0
      %p143 = por %p141, %p142
      %p144 = scmp.ne.s32.totalorder %s136, %s138
      %p145 = scmp.eq.s32.totalorder %s18, 1
      %p146 = por %p144, %p145
      %p147 = scmp.ne.s32.totalorder %s138, %s139
      %p148 = scmp.eq.s32.totalorder %s18, 0
      %p149 = por %p147, %p148
      %p150 = scmp.ne.s32.totalorder %s138, %s139
      %p151 = scmp.eq.s32.totalorder %s19, 1
      %p152 = por %p150, %p151
      %p154 = scmp.ne.s32.totalorder %s139, %s153
      %p155 = scmp.eq.s32.totalorder %s19, 0
      %p156 = por %p154, %p155
      %s158 = sadd.s32 %s157, 1
      %p161 = scmp.eq.s32.totalorder %s13, 1
      %p162 = scmp.ne.s32.totalorder %s157, %s159
      %p163 = scmp.eq.s32.totalorder %s13, 0
      %p164 = por %p162, %p163
      %p165 = scmp.ne.s32.totalorder %s157, %s159
      %p166 = scmp.eq.s32.totalorder %s18, 1
      %p167 = por %p165, %p166
      %p168 = scmp.ne.s32.totalorder %s159, %s160
      %p169 = scmp.eq.s32.totalorder %s18, 0
      %p170 = por %p168, %p169
      %p171 = scmp.ne.s32.totalorder %s159, %s160
      %p172 = scmp.eq.s32.totalorder %s19, 1
      %p173 = por %p171, %p172
      %p175 = scmp.ne.s32.totalorder %s160, %s174
      %p176 = scmp.eq.s32.totalorder %s19, 0
      %p177 = por %p175, %p176
      %s178 = ssub.s32 %s13, %s20
      %p179 = scmp.eq.s32.totalorder %s178, 0
      %s181 = sadd.s32 %s180, 1
      %s182 = scalar_select %p179, %s180, %s181
      %p185 = pneg %p179
      %p186 = scmp.eq.s32.totalorder %s13, 1
      %p187 = por %p185, %p186
      %p188 = scmp.ne.s32.totalorder %s180, %s183
      %p189 = scmp.eq.s32.totalorder %s13, 0
      %p190 = por %p188, %p189
      %p191 = scmp.ne.s32.totalorder %s180, %s183
      %p192 = scmp.eq.s32.totalorder %s18, 1
      %p193 = por %p191, %p192
      %p194 = scmp.ne.s32.totalorder %s183, %s184
      %p195 = scmp.eq.s32.totalorder %s18, 0
      %p196 = por %p194, %p195
      %p197 = scmp.ne.s32.totalorder %s183, %s184
      %p198 = scmp.eq.s32.totalorder %s19, 1
      %p199 = por %p197, %p198
      %p201 = scmp.ne.s32.totalorder %s184, %s200
      %p202 = scmp.eq.s32.totalorder %s19, 0
      %p203 = por %p201, %p202
      %p204 = scmp.le.s32.totalorder 1, %s13
      %p205 = scmp.lt.s32.totalorder %s13, 3
      %p206 = pnand %p204, %p205
      %p207 = pneg %p206
      // Predicated region
      $region9: #{flowgnn_conv_block.3} parent=5 // pred_check
        _
      $region10: #{flowgnn_conv_block.3} parent=5 // pred_check_branch
        %209 = sbr.rel (%p206) target = $region12
      $region11: #{flowgnn_conv_block.3} parent=5 // pred_region
        %s210 = ssub.s32 %s13, 1
        // Predicated region
        $region13: #{flowgnn_conv_block.3} parent=11 // pred_check
          %p211 = pneg %p86
        $region14: #{flowgnn_conv_block.3} parent=11 // pred_check_branch
          %213 = sbr.rel (%p211) target = $region16
        $region15: #{flowgnn_conv_block.3} parent=11 // pred_region
          _
        $region16: #{flowgnn_conv_block.3} parent=11 // pred_fallthru
          _
        // Predicated region
        $region17: #{flowgnn_conv_block.3} parent=11 // pred_check
          %p214 = pneg %p107
        $region18: #{flowgnn_conv_block.3} parent=11 // pred_check_branch
          %216 = sbr.rel (%p214) target = $region20
        $region19: #{flowgnn_conv_block.3} parent=11 // pred_region
          _
        $region20: #{flowgnn_conv_block.3} parent=11 // pred_fallthru
          _
        // Predicated region
        $region21: #{flowgnn_conv_block.3} parent=11 // pred_check
          %p217 = pneg %p128
        $region22: #{flowgnn_conv_block.3} parent=11 // pred_check_branch
          %219 = sbr.rel (%p217) target = $region24
        $region23: #{flowgnn_conv_block.3} parent=11 // pred_region
          _
        $region24: #{flowgnn_conv_block.3} parent=11 // pred_fallthru
          _
        // Predicated region
        $region25: #{flowgnn_conv_block.3} parent=11 // pred_check
          %p220 = pneg %p149
        $region26: #{flowgnn_conv_block.3} parent=11 // pred_check_branch
          %222 = sbr.rel (%p220) target = $region28
        $region27: #{flowgnn_conv_block.3} parent=11 // pred_region
          _
        $region28: #{flowgnn_conv_block.3} parent=11 // pred_fallthru
          _
        // Predicated region
        $region29: #{flowgnn_conv_block.3} parent=11 // pred_check
          %p223 = pneg %p170
        $region30: #{flowgnn_conv_block.3} parent=11 // pred_check_branch
          %225 = sbr.rel (%p223) target = $region32
        $region31: #{flowgnn_conv_block.3} parent=11 // pred_region
          _
        $region32: #{flowgnn_conv_block.3} parent=11 // pred_fallthru
          _
      $region12: #{flowgnn_conv_block.3} parent=5 // pred_fallthru
        _
      %p226 = scmp.lt.s32.totalorder %s13, 2
      // Predicated region
      $region33: #{flowgnn_conv_block.3} parent=5 // pred_check
        %p227 = pneg %p226
      $region34: #{flowgnn_conv_block.3} parent=5 // pred_check_branch
        %229 = sbr.rel (%p227) target = $region36
      $region35: #{flowgnn_conv_block.3} parent=5 // pred_region
        // Predicated region
        $region37: #{flowgnn_conv_block.3} parent=35 // pred_check
          %p230 = pneg %p33
        $region38: #{flowgnn_conv_block.3} parent=35 // pred_check_branch
          %232 = sbr.rel (%p230) target = $region40
        $region39: #{flowgnn_conv_block.3} parent=35 // pred_region
          %s233 = smul.u32 14, %s13
          %s234 = ssub.s32 25, %s233
          %p235 = scmp.lt.s32.totalorder %s234, 14
          %s236 = scalar_select %p235, %s234, 14
          %s237 = smul.u32 64, %s236
          %p238 = scmp.lt.s32.totalorder %s233, 24
          %s239 = scalar_select %p238, %s233, 24
          %s240 = smul.addr %s239, 4
          %s241 = scalar_lea.vmem %s0, %s240
          %s242 = smul.u32 14, %s13
          %s243 = ssub.s32 25, %s242
          %p244 = scmp.lt.s32.totalorder %s243, 14
          %s245 = scalar_select %p244, %s243, 14
          %s246 = smul.u32 64, %s245
        $region40: #{flowgnn_conv_block.3} parent=35 // pred_fallthru
          _
        // Predicated region
        $region41: #{flowgnn_conv_block.3} parent=35 // pred_check
          %p247 = pneg %p59
        $region42: #{flowgnn_conv_block.3} parent=35 // pred_check_branch
          %249 = sbr.rel (%p247) target = $region44
        $region43: #{flowgnn_conv_block.3} parent=35 // pred_region
          %s250 = smul.u32 14, %s13
          %s251 = ssub.s32 25, %s250
          %p252 = scmp.lt.s32.totalorder %s251, 14
          %s253 = scalar_select %p252, %s251, 14
          %s254 = smul.u32 64, %s253
          %p255 = scmp.lt.s32.totalorder %s250, 24
          %s256 = scalar_select %p255, %s250, 24
          %s257 = smul.addr %s256, 4
          %s258 = scalar_lea.vmem %s1, %s257
          %s259 = smul.u32 14, %s13
          %s260 = ssub.s32 25, %s259
          %p261 = scmp.lt.s32.totalorder %s260, 14
          %s262 = scalar_select %p261, %s260, 14
          %s263 = smul.u32 64, %s262
        $region44: #{flowgnn_conv_block.3} parent=35 // pred_fallthru
          _
      $region36: #{flowgnn_conv_block.3} parent=5 // pred_fallthru
        _
      %p264 = scmp.le.s32.totalorder 1, %s13
      %p265 = scmp.lt.s32.totalorder %s13, 3
      %p266 = pnand %p264, %p265
      %p267 = pneg %p266
      // Predicated region
      $region45: #{flowgnn_conv_block.3} parent=5 // pred_check
        _
      $region46: #{flowgnn_conv_block.3} parent=5 // pred_check_branch
        %269 = sbr.rel (%p266) target = $region48
      $region47: #{flowgnn_conv_block.3} parent=5 // pred_region
        %s270 = ssub.s32 %s13, 1
        %s271 = smul.u32 14, %s18
        %s272 = ssub.s32 25, %s271
        %p273 = scmp.lt.s32.totalorder %s272, 14
        %s274 = scalar_select %p273, %s272, 14
        %s275 = smul.u32 64, %s274
        %p276 = scmp.lt.s32.totalorder %s271, 24
        %s277 = scalar_select %p276, %s271, 24
        %s278 = smul.addr %s277, 4
        %s279 = scalar_lea.vmem %s0, %s278
        %p280 = pneg %p39
        %p281 = pneg %p36
        %s282 = smul.u32 14, %s18
        %s283 = ssub.s32 25, %s282
        %p284 = scmp.lt.s32.totalorder %s283, 14
        %s285 = scalar_select %p284, %s283, 14
        %s286 = smul.u32 64, %s285
        %p287 = scmp.lt.s32.totalorder %s282, 24
        %s288 = scalar_select %p287, %s282, 24
        %s289 = smul.addr %s288, 4
        %s290 = scalar_lea.vmem %s1, %s289
        %p291 = pneg %p65
        %p292 = pneg %p62
        %p293 = pneg %p86
        %p294 = pneg %p83
        %p295 = pneg %p107
        %p296 = pneg %p104
        %p297 = pneg %p128
        %p298 = pneg %p125
        %p299 = pneg %p149
        %p300 = pneg %p146
        %p301 = pneg %p170
        %p302 = pneg %p167
        %p303 = pneg %p196
        %p304 = pneg %p193
        %s305 = sand.u32 %s183, 1
        %s306 = sand.u32 %s183, 1
        %s307 = smul.addr %s306, 112
        %s308 = scalar_lea.vmem [#allocation2], %s307
        %s309 = smul.u32 14, %s18
        %s310 = ssub.s32 25, %s309
        %p311 = scmp.lt.s32.totalorder %s310, 14
        %s312 = scalar_select %p311, %s310, 14
        %s313 = smul.u32 64, %s312
        %p314 = scmp.lt.s32.totalorder %s309, 24
        %s315 = scalar_select %p314, %s309, 24
        %s316 = smul.addr %s315, 4
        %s317 = scalar_lea.vmem %s0, %s316
        %s318 = smul.u32 14, %s18
        %s319 = ssub.s32 25, %s318
        %p320 = scmp.lt.s32.totalorder %s319, 14
        %s321 = scalar_select %p320, %s319, 14
        %s322 = smul.u32 64, %s321
        %s323 = smul.u32 14, %s18
        %s324 = ssub.s32 25, %s323
        %p325 = scmp.lt.s32.totalorder %s324, 14
        %s326 = scalar_select %p325, %s324, 14
        %s327 = smul.u32 64, %s326
        %p328 = scmp.lt.s32.totalorder %s323, 24
        %s329 = scalar_select %p328, %s323, 24
        %s330 = smul.addr %s329, 4
        %s331 = scalar_lea.vmem %s1, %s330
        %s332 = smul.u32 14, %s18
        %s333 = ssub.s32 25, %s332
        %p334 = scmp.lt.s32.totalorder %s333, 14
        %s335 = scalar_select %p334, %s333, 14
        %s336 = smul.u32 64, %s335
        %s337 = smul.u32 14, %s18
        %s338 = ssub.s32 25, %s337
        %p339 = scmp.lt.s32.totalorder %s338, 14
        %s340 = scalar_select %p339, %s338, 14
        %s341 = smul.u32 128, %s340
        %v343 = vld [vmem:[%s317] sm:$0xf]
        %v344 = vld [vmem:[%s317 + $0x4] sm:$0xf]
        %v345 = vld [vmem:[%s317 + $0x8] sm:$0xf]
        %v346 = vld [vmem:[%s317 + $0xc] sm:$0xf]
        %v347 = vld [vmem:[%s317 + $0x10] sm:$0xf]
        %v348 = vld [vmem:[%s317 + $0x14] sm:$0xf]
        %v349 = vld [vmem:[%s317 + $0x18] sm:$0xf]
        %v350 = vld [vmem:[%s317 + $0x1c] sm:$0xf]
        %v351 = vld [vmem:[%s317 + $0x20] sm:$0xf]
        %v352 = vld [vmem:[%s317 + $0x24] sm:$0xf]
        %v353 = vld [vmem:[%s317 + $0x28] sm:$0xf]
        %v354 = vld [vmem:[%s317 + $0x2c] sm:$0xf]
        %v355 = vld [vmem:[%s317 + $0x30] sm:$0xf]
        %v356 = vld [vmem:[%s317 + $0x34] sm:$0xf]
        %v357 = vld [vmem:[%s2] sm:$0xf]
        %v358 = vld [vmem:[%s2 + $0x4] sm:$0x7]
        %v359 = vld [vmem:[%s331] sm:$0xf]
        %v360 = vld [vmem:[%s331 + $0x4] sm:$0xf]
        %v361 = vld [vmem:[%s331 + $0x8] sm:$0xf]
        %v362 = vld [vmem:[%s331 + $0xc] sm:$0xf]
        %v363 = vld [vmem:[%s331 + $0x10] sm:$0xf]
        %v364 = vld [vmem:[%s331 + $0x14] sm:$0xf]
        %v365 = vld [vmem:[%s331 + $0x18] sm:$0xf]
        %v366 = vld [vmem:[%s331 + $0x1c] sm:$0xf]
        %v367 = vld [vmem:[%s331 + $0x20] sm:$0xf]
        %v368 = vld [vmem:[%s331 + $0x24] sm:$0xf]
        %v369 = vld [vmem:[%s331 + $0x28] sm:$0xf]
        %v370 = vld [vmem:[%s331 + $0x2c] sm:$0xf]
        %v371 = vld [vmem:[%s331 + $0x30] sm:$0xf]
        %v372 = vld [vmem:[%s331 + $0x34] sm:$0xf]
        %v373 = vld [vmem:[%s3] sm:$0xf]
        %v374 = vld [vmem:[%s3 + $0x4] sm:$0xf]
        %v389 = vunpack.c.l.b16 %v359
        %v390 = vunpack.c.l.b16 %v360
        %v391 = vunpack.c.l.b16 %v361
        %v392 = vunpack.c.l.b16 %v362
        %v393 = vunpack.c.l.b16 %v363
        %v394 = vunpack.c.l.b16 %v364
        %v395 = vunpack.c.l.b16 %v365
        %v396 = vunpack.c.l.b16 %v366
        %v397 = vunpack.c.l.b16 %v367
        %v398 = vunpack.c.l.b16 %v368
        %v399 = vunpack.c.l.b16 %v369
        %v400 = vunpack.c.l.b16 %v370
        %v401 = vunpack.c.l.b16 %v371
        %v402 = vunpack.c.l.b16 %v372
        %v403 = vpack.c.b16 %v390, %v389
        %v404 = vpack.c.b16 %v392, %v391
        %v405 = vpack.c.b16 %v394, %v393
        %v406 = vpack.c.b16 %v396, %v395
        %v407 = vpack.c.b16 %v398, %v397
        %v408 = vpack.c.b16 %v400, %v399
        %v409 = vpack.c.b16 %v402, %v401
        %v412 = vunpack.c.l.b16 %v373
        %v413 = vunpack.c.l.b16 %v374
        %v414 = vpack.c.b16 %v413, %v412
        %vm416 = vcmask 130048
        %v418 = vsel %vm416, %v403, 0
        %v421 = vsel %vm416, %v404, 0
        %v424 = vsel %vm416, %v405, 0
        %v427 = vsel %vm416, %v406, 0
        %v430 = vsel %vm416, %v407, 0
        %v433 = vsel %vm416, %v408, 0
        %v436 = vsel %vm416, %v409, 0
        %438 = vmatprep.subr.bf16.mxu0 0
        %439 = vmatpush1.bf16.msra.mxu0 0
        %440 = vmatprep.subr.bf16.mxu0 0
        %441 = vmatpush1.bf16.msra.mxu0 0
        %442 = vmatprep.subr.bf16.mxu0 0
        %443 = vmatpush1.bf16.msra.mxu0 0
        %444 = vmatprep.subr.bf16.mxu0 0
        %445 = vmatpush1.bf16.msra.mxu0 0
        %446 = vmatprep.subr.bf16.mxu0 0
        %447 = vmatpush1.bf16.msra.mxu0 0
        %448 = vmatprep.subr.bf16.mxu0 0
        %449 = vmatpush1.bf16.msra.mxu0 0
        %450 = vmatprep.subr.bf16.mxu0 0
        %451 = vmatpush1.bf16.msra.mxu0 0
        %452 = vmatprep.subr.bf16.mxu0 0
        %453 = vmatpush1.bf16.msra.mxu0 %v414
        %454 = vmatprep.subr.bf16.mxu0 0
        %455 = vmatpush2.bf16.msra.mxu0 0
        %456 = vmatprep.subr.bf16.mxu0 0
        %457 = vmatpush2.bf16.msra.mxu0 0
        %458 = vmatprep.subr.bf16.mxu0 0
        %459 = vmatpush2.bf16.msra.mxu0 0
        %460 = vmatprep.subr.bf16.mxu0 0
        %461 = vmatpush2.bf16.msra.mxu0 0
        %462 = vmatprep.subr.bf16.mxu0 0
        %463 = vmatpush2.bf16.msra.mxu0 0
        %464 = vmatprep.subr.bf16.mxu0 0
        %465 = vmatpush2.bf16.msra.mxu0 0
        %466 = vmatprep.subr.bf16.mxu0 0
        %467 = vmatpush2.bf16.msra.mxu0 0
        %468 = vmatprep.subr.bf16.mxu0 0
        %469 = vmatpush2.bf16.msra.mxu0 0
        %470 = vmatprep.mubr.bf16.mxu0 0
        %471 = vmatmul.mubr.bf16.gmra.mxu0 %v418
        %v472 = vpop.f32.mrf.mxu0
        %v473 = vadd.f32 0.0, %v472
        %v474 = vpop.f32.mrf.mxu0
        %v475 = vpop.f32.mrf.mxu0
        %v476 = vadd.f32 0.0, %v475
        %v477 = vpop.f32.mrf.mxu0
        %478 = vmatprep.mubr.bf16.mxu0 0
        %479 = vmatmul.mubr.bf16.gmra.mxu0 %v421
        %v480 = vpop.f32.mrf.mxu0
        %v481 = vadd.f32 0.0, %v480
        %v482 = vpop.f32.mrf.mxu0
        %v483 = vpop.f32.mrf.mxu0
        %v484 = vadd.f32 0.0, %v483
        %v485 = vpop.f32.mrf.mxu0
        %486 = vmatprep.mubr.bf16.mxu0 0
        %487 = vmatmul.mubr.bf16.gmra.mxu0 %v424
        %v488 = vpop.f32.mrf.mxu0
        %v489 = vadd.f32 0.0, %v488
        %v490 = vpop.f32.mrf.mxu0
        %v491 = vpop.f32.mrf.mxu0
        %v492 = vadd.f32 0.0, %v491
        %v493 = vpop.f32.mrf.mxu0
        %494 = vmatprep.mubr.bf16.mxu0 0
        %495 = vmatmul.mubr.bf16.gmra.mxu0 %v427
        %v496 = vpop.f32.mrf.mxu0
        %v497 = vadd.f32 0.0, %v496
        %v498 = vpop.f32.mrf.mxu0
        %v499 = vpop.f32.mrf.mxu0
        %v500 = vadd.f32 0.0, %v499
        %v501 = vpop.f32.mrf.mxu0
        %502 = vmatprep.mubr.bf16.mxu0 0
        %503 = vmatmul.mubr.bf16.gmra.mxu0 %v430
        %v504 = vpop.f32.mrf.mxu0
        %v505 = vadd.f32 0.0, %v504
        %v506 = vpop.f32.mrf.mxu0
        %v507 = vpop.f32.mrf.mxu0
        %v508 = vadd.f32 0.0, %v507
        %v509 = vpop.f32.mrf.mxu0
        %510 = vmatprep.mubr.bf16.mxu0 0
        %511 = vmatmul.mubr.bf16.gmra.mxu0 %v433
        %v512 = vpop.f32.mrf.mxu0
        %v513 = vadd.f32 0.0, %v512
        %v514 = vpop.f32.mrf.mxu0
        %v515 = vpop.f32.mrf.mxu0
        %v516 = vadd.f32 0.0, %v515
        %v517 = vpop.f32.mrf.mxu0
        %518 = vmatprep.mubr.bf16.mxu0 0
        %519 = vmatmul.mubr.bf16.gmra.mxu0 %v436
        %v520 = vpop.f32.mrf.mxu0
        %v521 = vadd.f32 0.0, %v520
        %v522 = vpop.f32.mrf.mxu0
        %v523 = vpop.f32.mrf.mxu0
        %v524 = vadd.f32 0.0, %v523
        %v525 = vpop.f32.mrf.mxu0
        %526 = vdwg.mxu0
        %v541 = vunpack.c.l.b16 %v343
        %v542 = vunpack.c.l.b16 %v344
        %v543 = vunpack.c.l.b16 %v345
        %v544 = vunpack.c.l.b16 %v346
        %v545 = vunpack.c.l.b16 %v347
        %v546 = vunpack.c.l.b16 %v348
        %v547 = vunpack.c.l.b16 %v349
        %v548 = vunpack.c.l.b16 %v350
        %v549 = vunpack.c.l.b16 %v351
        %v550 = vunpack.c.l.b16 %v352
        %v551 = vunpack.c.l.b16 %v353
        %v552 = vunpack.c.l.b16 %v354
        %v553 = vunpack.c.l.b16 %v355
        %v554 = vunpack.c.l.b16 %v356
        %v555 = vpack.c.b16 %v542, %v541
        %v556 = vpack.c.b16 %v544, %v543
        %v557 = vpack.c.b16 %v546, %v545
        %v558 = vpack.c.b16 %v548, %v547
        %v559 = vpack.c.b16 %v550, %v549
        %v560 = vpack.c.b16 %v552, %v551
        %v561 = vpack.c.b16 %v554, %v553
        %v564 = vunpack.c.l.b16 %v357
        %v565 = vunpack.c.l.b16 %v358
        %v566 = vpack.c.b16 %v565, %v564
        %vm567 = vcmask 105472
        %v569 = vsel %vm567, %v555, 0
        %v572 = vsel %vm567, %v556, 0
        %v575 = vsel %vm567, %v557, 0
        %v578 = vsel %vm567, %v558, 0
        %v581 = vsel %vm567, %v559, 0
        %v584 = vsel %vm567, %v560, 0
        %v587 = vsel %vm567, %v561, 0
        %vm589 = vcmask 1045504
        %vm590 = vcmask 1046528
        %v591 = vsel %vm589, 4294967295, 65535
        %v592 = vsel %vm590, %v591, 0
        %v594 = vand.u32 %v566, %v592
        %596 = vmatprep.subr.bf16.mxu0 0
        %597 = vmatpush1.bf16.msra.mxu0 0
        %598 = vmatprep.subr.bf16.mxu0 0
        %599 = vmatpush1.bf16.msra.mxu0 0
        %600 = vmatprep.subr.bf16.mxu0 0
        %601 = vmatpush1.bf16.msra.mxu0 0
        %602 = vmatprep.subr.bf16.mxu0 0
        %603 = vmatpush1.bf16.msra.mxu0 0
        %604 = vmatprep.subr.bf16.mxu0 0
        %605 = vmatpush1.bf16.msra.mxu0 0
        %606 = vmatprep.subr.bf16.mxu0 0
        %607 = vmatpush1.bf16.msra.mxu0 0
        %608 = vmatprep.subr.bf16.mxu0 0
        %609 = vmatpush1.bf16.msra.mxu0 0
        %610 = vmatprep.subr.bf16.mxu0 0
        %611 = vmatpush1.bf16.msra.mxu0 %v594
        %612 = vmatprep.subr.bf16.mxu0 0
        %613 = vmatpush2.bf16.msra.mxu0 0
        %614 = vmatprep.subr.bf16.mxu0 0
        %615 = vmatpush2.bf16.msra.mxu0 0
        %616 = vmatprep.subr.bf16.mxu0 0
        %617 = vmatpush2.bf16.msra.mxu0 0
        %618 = vmatprep.subr.bf16.mxu0 0
        %619 = vmatpush2.bf16.msra.mxu0 0
        %620 = vmatprep.subr.bf16.mxu0 0
        %621 = vmatpush2.bf16.msra.mxu0 0
        %622 = vmatprep.subr.bf16.mxu0 0
        %623 = vmatpush2.bf16.msra.mxu0 0
        %624 = vmatprep.subr.bf16.mxu0 0
        %625 = vmatpush2.bf16.msra.mxu0 0
        %626 = vmatprep.subr.bf16.mxu0 0
        %627 = vmatpush2.bf16.msra.mxu0 0
        %628 = vmatprep.mubr.bf16.mxu0 0
        %629 = vmatmul.mubr.bf16.gmra.mxu0 %v569
        %v630 = vpop.f32.mrf.mxu0
        %v631 = vadd.f32 %v473, %v630
        %v632 = vpop.f32.mrf.mxu0
        %v633 = vpop.f32.mrf.mxu0
        %v634 = vadd.f32 %v476, %v633
        %v635 = vpop.f32.mrf.mxu0
        %636 = vmatprep.mubr.bf16.mxu0 0
        %637 = vmatmul.mubr.bf16.gmra.mxu0 %v572
        %v638 = vpop.f32.mrf.mxu0
        %v639 = vadd.f32 %v481, %v638
        %v640 = vpop.f32.mrf.mxu0
        %v641 = vpop.f32.mrf.mxu0
        %v642 = vadd.f32 %v484, %v641
        %v643 = vpop.f32.mrf.mxu0
        %644 = vmatprep.mubr.bf16.mxu0 0
        %645 = vmatmul.mubr.bf16.gmra.mxu0 %v575
        %v646 = vpop.f32.mrf.mxu0
        %v647 = vadd.f32 %v489, %v646
        %v648 = vpop.f32.mrf.mxu0
        %v649 = vpop.f32.mrf.mxu0
        %v650 = vadd.f32 %v492, %v649
        %v651 = vpop.f32.mrf.mxu0
        %652 = vmatprep.mubr.bf16.mxu0 0
        %653 = vmatmul.mubr.bf16.gmra.mxu0 %v578
        %v654 = vpop.f32.mrf.mxu0
        %v655 = vadd.f32 %v497, %v654
        %v656 = vpop.f32.mrf.mxu0
        %v657 = vpop.f32.mrf.mxu0
        %v658 = vadd.f32 %v500, %v657
        %v659 = vpop.f32.mrf.mxu0
        %660 = vmatprep.mubr.bf16.mxu0 0
        %661 = vmatmul.mubr.bf16.gmra.mxu0 %v581
        %v662 = vpop.f32.mrf.mxu0
        %v663 = vadd.f32 %v505, %v662
        %v664 = vpop.f32.mrf.mxu0
        %v665 = vpop.f32.mrf.mxu0
        %v666 = vadd.f32 %v508, %v665
        %v667 = vpop.f32.mrf.mxu0
        %668 = vmatprep.mubr.bf16.mxu0 0
        %669 = vmatmul.mubr.bf16.gmra.mxu0 %v584
        %v670 = vpop.f32.mrf.mxu0
        %v671 = vadd.f32 %v513, %v670
        %v672 = vpop.f32.mrf.mxu0
        %v673 = vpop.f32.mrf.mxu0
        %v674 = vadd.f32 %v516, %v673
        %v675 = vpop.f32.mrf.mxu0
        %676 = vmatprep.mubr.bf16.mxu0 0
        %677 = vmatmul.mubr.bf16.gmra.mxu0 %v587
        %v678 = vpop.f32.mrf.mxu0
        %v679 = vadd.f32 %v521, %v678
        %v680 = vpop.f32.mrf.mxu0
        %v681 = vpop.f32.mrf.mxu0
        %v682 = vadd.f32 %v524, %v681
        %v683 = vpop.f32.mrf.mxu0
        %684 = vdwg.mxu0
        %v685 = vld [vmem:[%s4] sm:$0x1]
        %v687 = vlaneseq
        %v688 = vshrl.u32 %v687, 7
        %v689 = vsub.s32 0, %v688
        %v690 = vrot.slane %v685, %v689
        %v692 = vadd.f32 %v631, %v690
        %v693 = vadd.f32 %v634, %v690
        %v694 = vadd.f32 %v639, %v690
        %v695 = vadd.f32 %v642, %v690
        %v696 = vadd.f32 %v647, %v690
        %v697 = vadd.f32 %v650, %v690
        %v698 = vadd.f32 %v655, %v690
        %v699 = vadd.f32 %v658, %v690
        %v700 = vadd.f32 %v663, %v690
        %v701 = vadd.f32 %v666, %v690
        %v702 = vadd.f32 %v671, %v690
        %v703 = vadd.f32 %v674, %v690
        %v704 = vadd.f32 %v679, %v690
        %v705 = vadd.f32 %v682, %v690
        %v706 = vmax.f32 %v692, 0.0
        %v707 = vmax.f32 %v693, 0.0
        %v708 = vmax.f32 %v694, 0.0
        %v709 = vmax.f32 %v695, 0.0
        %v710 = vmax.f32 %v696, 0.0
        %v711 = vmax.f32 %v697, 0.0
        %v712 = vmax.f32 %v698, 0.0
        %v713 = vmax.f32 %v699, 0.0
        %v714 = vmax.f32 %v700, 0.0
        %v715 = vmax.f32 %v701, 0.0
        %v716 = vmax.f32 %v702, 0.0
        %v717 = vmax.f32 %v703, 0.0
        %v718 = vmax.f32 %v704, 0.0
        %v719 = vmax.f32 %v705, 0.0
        %v720 = vpack.c.bf16 %v707, %v706
        %v721 = vpack.c.bf16 %v709, %v708
        %v722 = vpack.c.bf16 %v711, %v710
        %v723 = vpack.c.bf16 %v713, %v712
        %v724 = vpack.c.bf16 %v715, %v714
        %v725 = vpack.c.bf16 %v717, %v716
        %v726 = vpack.c.bf16 %v719, %v718
        %v727 = vld [vmem:[%s5] sm:$0xf]
        %v728 = vld [vmem:[%s5 + $0x4] sm:$0xf]
        %v729 = vld [vmem:[%s5 + $0x8] sm:$0xf]
        %v730 = vld [vmem:[%s5 + $0xc] sm:$0xf]
        %v731 = vld [vmem:[%s5 + $0x10] sm:$0xf]
        %v732 = vld [vmem:[%s5 + $0x14] sm:$0xf]
        %v733 = vld [vmem:[%s5 + $0x18] sm:$0xf]
        %v734 = vld [vmem:[%s5 + $0x1c] sm:$0xf]
        %v735 = vld [vmem:[%s5 + $0x20] sm:$0xf]
        %v736 = vld [vmem:[%s5 + $0x24] sm:$0xf]
        %v737 = vld [vmem:[%s5 + $0x28] sm:$0xf]
        %v738 = vld [vmem:[%s5 + $0x2c] sm:$0xf]
        %v739 = vld [vmem:[%s5 + $0x30] sm:$0xf]
        %v740 = vld [vmem:[%s5 + $0x34] sm:$0xf]
        %v741 = vld [vmem:[%s5 + $0x38] sm:$0xf]
        %v742 = vld [vmem:[%s5 + $0x3c] sm:$0xf]
        %v743 = vld [vmem:[%s6] sm:$0x1]
        %v745 = vlaneseq
        %v746 = vshrl.u32 %v745, 7
        %v747 = vsub.s32 0, %v746
        %v748 = vrot.slane %v743, %v747
        %v766 = vunpack.c.l.b16 %v727
        %v767 = vunpack.c.l.b16 %v728
        %v768 = vunpack.c.l.b16 %v729
        %v769 = vunpack.c.l.b16 %v730
        %v770 = vunpack.c.l.b16 %v731
        %v771 = vunpack.c.l.b16 %v732
        %v772 = vunpack.c.l.b16 %v733
        %v773 = vunpack.c.l.b16 %v734
        %v774 = vunpack.c.l.b16 %v735
        %v775 = vunpack.c.l.b16 %v736
        %v776 = vunpack.c.l.b16 %v737
        %v777 = vunpack.c.l.b16 %v738
        %v778 = vunpack.c.l.b16 %v739
        %v779 = vunpack.c.l.b16 %v740
        %v780 = vunpack.c.l.b16 %v741
        %v781 = vunpack.c.l.b16 %v742
        %v782 = vpack.c.b16 %v767, %v766
        %v783 = vpack.c.b16 %v769, %v768
        %v784 = vpack.c.b16 %v771, %v770
        %v785 = vpack.c.b16 %v773, %v772
        %v786 = vpack.c.b16 %v775, %v774
        %v787 = vpack.c.b16 %v777, %v776
        %v788 = vpack.c.b16 %v779, %v778
        %v789 = vpack.c.b16 %v781, %v780
        %798 = vmatprep.subr.bf16.mxu0 0
        %799 = vmatpush1.bf16.msra.mxu0 %v789
        %800 = vmatprep.subr.bf16.mxu0 0
        %801 = vmatpush1.bf16.msra.mxu0 %v788
        %802 = vmatprep.subr.bf16.mxu0 0
        %803 = vmatpush1.bf16.msra.mxu0 %v787
        %804 = vmatprep.subr.bf16.mxu0 0
        %805 = vmatpush1.bf16.msra.mxu0 %v786
        %806 = vmatprep.subr.bf16.mxu0 0
        %807 = vmatpush1.bf16.msra.mxu0 %v785
        %808 = vmatprep.subr.bf16.mxu0 0
        %809 = vmatpush1.bf16.msra.mxu0 %v784
        %810 = vmatprep.subr.bf16.mxu0 0
        %811 = vmatpush1.bf16.msra.mxu0 %v783
        %812 = vmatprep.subr.bf16.mxu0 0
        %813 = vmatpush1.bf16.msra.mxu0 %v782
        %814 = vmatprep.subr.bf16.mxu0 0
        %815 = vmatpush2.bf16.msra.mxu0 0
        %816 = vmatprep.subr.bf16.mxu0 0
        %817 = vmatpush2.bf16.msra.mxu0 0
        %818 = vmatprep.subr.bf16.mxu0 0
        %819 = vmatpush2.bf16.msra.mxu0 0
        %820 = vmatprep.subr.bf16.mxu0 0
        %821 = vmatpush2.bf16.msra.mxu0 0
        %822 = vmatprep.subr.bf16.mxu0 0
        %823 = vmatpush2.bf16.msra.mxu0 0
        %824 = vmatprep.subr.bf16.mxu0 0
        %825 = vmatpush2.bf16.msra.mxu0 0
        %826 = vmatprep.subr.bf16.mxu0 0
        %827 = vmatpush2.bf16.msra.mxu0 0
        %828 = vmatprep.subr.bf16.mxu0 0
        %829 = vmatpush2.bf16.msra.mxu0 0
        %830 = vmatprep.mubr.bf16.mxu0 0
        %831 = vmatmul.mubr.bf16.gmra.mxu0 %v720
        %v832 = vpop.f32.mrf.mxu0
        %v833 = vadd.f32 %v748, %v832
        %v834 = vpop.f32.mrf.mxu0
        %v835 = vpop.f32.mrf.mxu0
        %v836 = vadd.f32 %v748, %v835
        %v837 = vpop.f32.mrf.mxu0
        %838 = vmatprep.mubr.bf16.mxu0 0
        %839 = vmatmul.mubr.bf16.gmra.mxu0 %v721
        %v840 = vpop.f32.mrf.mxu0
        %v841 = vadd.f32 %v748, %v840
        %v842 = vpop.f32.mrf.mxu0
        %v843 = vpop.f32.mrf.mxu0
        %v844 = vadd.f32 %v748, %v843
        %v845 = vpop.f32.mrf.mxu0
        %846 = vmatprep.mubr.bf16.mxu0 0
        %847 = vmatmul.mubr.bf16.gmra.mxu0 %v722
        %v848 = vpop.f32.mrf.mxu0
        %v849 = vadd.f32 %v748, %v848
        %v850 = vpop.f32.mrf.mxu0
        %v851 = vpop.f32.mrf.mxu0
        %v852 = vadd.f32 %v748, %v851
        %v853 = vpop.f32.mrf.mxu0
        %854 = vmatprep.mubr.bf16.mxu0 0
        %855 = vmatmul.mubr.bf16.gmra.mxu0 %v723
        %v856 = vpop.f32.mrf.mxu0
        %v857 = vadd.f32 %v748, %v856
        %v858 = vpop.f32.mrf.mxu0
        %v859 = vpop.f32.mrf.mxu0
        %v860 = vadd.f32 %v748, %v859
        %v861 = vpop.f32.mrf.mxu0
        %862 = vmatprep.mubr.bf16.mxu0 0
        %863 = vmatmul.mubr.bf16.gmra.mxu0 %v724
        %v864 = vpop.f32.mrf.mxu0
        %v865 = vadd.f32 %v748, %v864
        %v866 = vpop.f32.mrf.mxu0
        %v867 = vpop.f32.mrf.mxu0
        %v868 = vadd.f32 %v748, %v867
        %v869 = vpop.f32.mrf.mxu0
        %870 = vmatprep.mubr.bf16.mxu0 0
        %871 = vmatmul.mubr.bf16.gmra.mxu0 %v725
        %v872 = vpop.f32.mrf.mxu0
        %v873 = vadd.f32 %v748, %v872
        %v874 = vpop.f32.mrf.mxu0
        %v875 = vpop.f32.mrf.mxu0
        %v876 = vadd.f32 %v748, %v875
        %v877 = vpop.f32.mrf.mxu0
        %878 = vmatprep.mubr.bf16.mxu0 0
        %879 = vmatmul.mubr.bf16.gmra.mxu0 %v726
        %v880 = vpop.f32.mrf.mxu0
        %v881 = vadd.f32 %v748, %v880
        %v882 = vpop.f32.mrf.mxu0
        %v883 = vpop.f32.mrf.mxu0
        %v884 = vadd.f32 %v748, %v883
        %v885 = vpop.f32.mrf.mxu0
        %886 = vdwg.mxu0
        %887 = vst.msk [vmem:[%s308] sm:$0xff] %vm416, %v833
        %888 = vst.msk [vmem:[%s308 + $0x8] sm:$0xff] %vm416, %v836
        %889 = vst.msk [vmem:[%s308 + $0x10] sm:$0xff] %vm416, %v841
        %890 = vst.msk [vmem:[%s308 + $0x18] sm:$0xff] %vm416, %v844
        %891 = vst.msk [vmem:[%s308 + $0x20] sm:$0xff] %vm416, %v849
        %892 = vst.msk [vmem:[%s308 + $0x28] sm:$0xff] %vm416, %v852
        %893 = vst.msk [vmem:[%s308 + $0x30] sm:$0xff] %vm416, %v857
        %894 = vst.msk [vmem:[%s308 + $0x38] sm:$0xff] %vm416, %v860
        %895 = vst.msk [vmem:[%s308 + $0x40] sm:$0xff] %vm416, %v865
        %896 = vst.msk [vmem:[%s308 + $0x48] sm:$0xff] %vm416, %v868
        %897 = vst.msk [vmem:[%s308 + $0x50] sm:$0xff] %vm416, %v873
        %898 = vst.msk [vmem:[%s308 + $0x58] sm:$0xff] %vm416, %v876
        %899 = vst.msk [vmem:[%s308 + $0x60] sm:$0xff] %vm416, %v881
        %900 = vst.msk [vmem:[%s308 + $0x68] sm:$0xff] %vm416, %v884
        %s901 = sand.u32 %s183, 1
        %s902 = sand.u32 %s183, 1
        %s903 = smul.addr %s902, 112
        %s904 = scalar_lea.vmem [#allocation2], %s903
        // Predicated region
        $region49: #{flowgnn_conv_block.3} parent=47 // pred_check
          %p905 = pneg %p193
        $region50: #{flowgnn_conv_block.3} parent=47 // pred_check_branch
          %907 = sbr.rel (%p905) target = $region52
        $region51: #{flowgnn_conv_block.3} parent=47 // pred_region
          %s908 = smul.u32 14, %s18
          %s909 = ssub.s32 25, %s908
          %p910 = scmp.lt.s32.totalorder %s909, 14
          %s911 = scalar_select %p910, %s909, 14
          %s912 = smul.u32 128, %s911
          %p913 = scmp.ne.s32.totalorder 0, %s912
          %s914 = smul.addr %s908, 8
          %s915 = scalar_lea.vmem %s7, %s914
          // Predicated region
          $region53: #{flowgnn_conv_block.3} parent=51 // pred_check
            %p916 = pneg %p913
          $region54: #{flowgnn_conv_block.3} parent=51 // pred_check_branch
            %918 = sbr.rel (%p916) target = $region56
          $region55: #{flowgnn_conv_block.3} parent=51 // pred_region
            // Predicated region
            $region57: #{flowgnn_conv_block.3} parent=55 // pred_check
              _
            $region58: #{flowgnn_conv_block.3} parent=55 // pred_check_branch
              %920 = sbr.rel (0) target = $region60
            $region59: #{flowgnn_conv_block.3} parent=55 // pred_region
              // Predicated region
              $region79: #{flowgnn_conv_block.3} parent=59 // pred_check
                _
              $region80: #{flowgnn_conv_block.3} parent=59 // pred_check_branch
                %997 = sbr.rel (0) target = $region82
              $region81: #{flowgnn_conv_block.3} parent=59 // pred_region
                %s998 = sdiv.u32.pop %s911, 14
                %s999 = srem.u32.pop %s911, 14
                // While loop
                $region83: #{flowgnn_conv_block.3} parent=81 // loop_pre_header
                  _
                $region84: #{flowgnn_conv_block.3} parent=81 // loop_header
                  %s1001 = sphi 0, %s1003
                  %p1002 = scmp.ge.s32.totalorder %s1001, %s998
                  %s1006 = sphi 0, %s1039
                  %s1007 = sphi %s904, %s1042
                  %s1008 = sphi %s915, %s1043
                $region85: #{flowgnn_conv_block.3} parent=81 // loop_header_branch
                  %1005 = sbr.rel (%p1002) target = $region89
                $region86: #{flowgnn_conv_block.3} parent=81 // loop_body
                  %v1009 = vld [vmem:[%s1007] sm:$0xff]
                  %1010 = vst [vmem:[%s1008] sm:$0xff] %v1009
                  %v1011 = vld [vmem:[%s1007 + $0x8] sm:$0xff]
                  %1012 = vst [vmem:[%s1008 + $0x8] sm:$0xff] %v1011
                  %v1013 = vld [vmem:[%s1007 + $0x10] sm:$0xff]
                  %1014 = vst [vmem:[%s1008 + $0x10] sm:$0xff] %v1013
                  %v1015 = vld [vmem:[%s1007 + $0x18] sm:$0xff]
                  %1016 = vst [vmem:[%s1008 + $0x18] sm:$0xff] %v1015
                  %v1017 = vld [vmem:[%s1007 + $0x20] sm:$0xff]
                  %1018 = vst [vmem:[%s1008 + $0x20] sm:$0xff] %v1017
                  %v1019 = vld [vmem:[%s1007 + $0x28] sm:$0xff]
                  %1020 = vst [vmem:[%s1008 + $0x28] sm:$0xff] %v1019
                  %v1021 = vld [vmem:[%s1007 + $0x30] sm:$0xff]
                  %1022 = vst [vmem:[%s1008 + $0x30] sm:$0xff] %v1021
                  %v1023 = vld [vmem:[%s1007 + $0x38] sm:$0xff]
                  %1024 = vst [vmem:[%s1008 + $0x38] sm:$0xff] %v1023
                  %v1025 = vld [vmem:[%s1007 + $0x40] sm:$0xff]
                  %1026 = vst [vmem:[%s1008 + $0x40] sm:$0xff] %v1025
                  %v1027 = vld [vmem:[%s1007 + $0x48] sm:$0xff]
                  %1028 = vst [vmem:[%s1008 + $0x48] sm:$0xff] %v1027
                  %v1029 = vld [vmem:[%s1007 + $0x50] sm:$0xff]
                  %1030 = vst [vmem:[%s1008 + $0x50] sm:$0xff] %v1029
                  %v1031 = vld [vmem:[%s1007 + $0x58] sm:$0xff]
                  %1032 = vst [vmem:[%s1008 + $0x58] sm:$0xff] %v1031
                  %v1033 = vld [vmem:[%s1007 + $0x60] sm:$0xff]
                  %1034 = vst [vmem:[%s1008 + $0x60] sm:$0xff] %v1033
                  %v1035 = vld [vmem:[%s1007 + $0x68] sm:$0xff]
                  %1036 = vst [vmem:[%s1008 + $0x68] sm:$0xff] %v1035
                  %s1037 = sadd.s32 1, %s1006
                  %p1038 = scmp.ge.s32.totalorder %s1037, %s998
                  %s1039 = scalar_select %p1038, 0, %s1037
                  %s1040 = smul.u32 %s1039, 112
                  %s1041 = smul.u32 %s1039, 112
                  %s1042 = scalar_lea.vmem %s904, %s1040 [#allocation2]
                  %s1043 = scalar_lea.vmem %s915, %s1041
                $region87: #{flowgnn_conv_block.3} parent=81 // loop_footer
                  %s1003 = sadd.s32 %s1001, 1
                $region88: #{flowgnn_conv_block.3} parent=81 // loop_footer_branch
                  %1000 = sbr.rel target = $region84
                $region89: #{flowgnn_conv_block.3} parent=81 // loop_exit
                  _
                %s1044 = sdiv.u32.pop %s911, 14
                %s1045 = srem.u32.pop %s911, 14
                %s1046 = smul.u32 %s1044, 14
                %s1047 = smul.u32 8, %s1046
                %s1048 = scalar_lea.vmem %s904, %s1047 [#allocation2]
                %s1049 = smul.u32 8, %s1046
                %s1050 = scalar_lea.vmem %s915, %s1049
                // While loop
                $region90: #{flowgnn_conv_block.3} parent=81 // loop_pre_header
                  _
                $region91: #{flowgnn_conv_block.3} parent=81 // loop_header
                  %s1052 = sphi 0, %s1054
                  %p1053 = scmp.ge.s32.totalorder %s1052, %s1045
                  %s1057 = sphi 0, %s1064
                  %s1058 = sphi %s1048, %s1067
                  %s1059 = sphi %s1050, %s1068
                $region92: #{flowgnn_conv_block.3} parent=81 // loop_header_branch
                  %1056 = sbr.rel (%p1053) target = $region96
                $region93: #{flowgnn_conv_block.3} parent=81 // loop_body
                  %v1060 = vld [vmem:[%s1058] sm:$0xff]
                  %1061 = vst [vmem:[%s1059] sm:$0xff] %v1060
                  %s1062 = sadd.s32 1, %s1057
                  %p1063 = scmp.ge.s32.totalorder %s1062, %s1045
                  %s1064 = scalar_select %p1063, 0, %s1062
                  %s1065 = smul.u32 %s1064, 8
                  %s1066 = smul.u32 %s1064, 8
                  %s1067 = scalar_lea.vmem %s1048, %s1065 [#allocation2]
                  %s1068 = scalar_lea.vmem %s1050, %s1066
                $region94: #{flowgnn_conv_block.3} parent=81 // loop_footer
                  %s1054 = sadd.s32 %s1052, 1
                $region95: #{flowgnn_conv_block.3} parent=81 // loop_footer_branch
                  %1051 = sbr.rel target = $region91
                $region96: #{flowgnn_conv_block.3} parent=81 // loop_exit
                  _
              $region82: #{flowgnn_conv_block.3} parent=59 // pred_fallthru
                _
              // Predicated region
              $region97: #{flowgnn_conv_block.3} parent=59 // pred_check
                _
              $region98: #{flowgnn_conv_block.3} parent=59 // pred_check_branch
                %1070 = sbr.rel target = $region100
              $region99: #{flowgnn_conv_block.3} parent=59 // pred_region
                _
              $region100: #{flowgnn_conv_block.3} parent=59 // pred_fallthru
                _
            $region60: #{flowgnn_conv_block.3} parent=55 // pred_fallthru
              _
            // Predicated region
            $region61: #{flowgnn_conv_block.3} parent=55 // pred_check
              _
            $region62: #{flowgnn_conv_block.3} parent=55 // pred_check_branch
              %922 = sbr.rel target = $region64
            $region63: #{flowgnn_conv_block.3} parent=55 // pred_region
              %s924 = ssub.s32 256, 1
              %s925 = sdiv.u32.pop %s911, 14
              %s926 = srem.u32.pop %s911, 14
              // While loop
              $region65: #{flowgnn_conv_block.3} parent=63 // loop_pre_header
                _
              $region66: #{flowgnn_conv_block.3} parent=63 // loop_header
                %s928 = sphi 0, %s930
                %p929 = scmp.ge.s32.totalorder %s928, %s925
                %s933 = sphi 0, %s966
                %s934 = sphi %s904, %s969
                %s935 = sphi %s915, %s970
              $region67: #{flowgnn_conv_block.3} parent=63 // loop_header_branch
                %932 = sbr.rel (%p929) target = $region71
              $region68: #{flowgnn_conv_block.3} parent=63 // loop_body
                %v936 = vld [vmem:[%s934] sm:%s924]
                %937 = vst [vmem:[%s935] sm:%s924] %v936
                %v938 = vld [vmem:[%s934 + $0x8] sm:%s924]
                %939 = vst [vmem:[%s935 + $0x8] sm:%s924] %v938
                %v940 = vld [vmem:[%s934 + $0x10] sm:%s924]
                %941 = vst [vmem:[%s935 + $0x10] sm:%s924] %v940
                %v942 = vld [vmem:[%s934 + $0x18] sm:%s924]
                %943 = vst [vmem:[%s935 + $0x18] sm:%s924] %v942
                %v944 = vld [vmem:[%s934 + $0x20] sm:%s924]
                %945 = vst [vmem:[%s935 + $0x20] sm:%s924] %v944
                %v946 = vld [vmem:[%s934 + $0x28] sm:%s924]
                %947 = vst [vmem:[%s935 + $0x28] sm:%s924] %v946
                %v948 = vld [vmem:[%s934 + $0x30] sm:%s924]
                %949 = vst [vmem:[%s935 + $0x30] sm:%s924] %v948
                %v950 = vld [vmem:[%s934 + $0x38] sm:%s924]
                %951 = vst [vmem:[%s935 + $0x38] sm:%s924] %v950
                %v952 = vld [vmem:[%s934 + $0x40] sm:%s924]
                %953 = vst [vmem:[%s935 + $0x40] sm:%s924] %v952
                %v954 = vld [vmem:[%s934 + $0x48] sm:%s924]
                %955 = vst [vmem:[%s935 + $0x48] sm:%s924] %v954
                %v956 = vld [vmem:[%s934 + $0x50] sm:%s924]
                %957 = vst [vmem:[%s935 + $0x50] sm:%s924] %v956
                %v958 = vld [vmem:[%s934 + $0x58] sm:%s924]
                %959 = vst [vmem:[%s935 + $0x58] sm:%s924] %v958
                %v960 = vld [vmem:[%s934 + $0x60] sm:%s924]
                %961 = vst [vmem:[%s935 + $0x60] sm:%s924] %v960
                %v962 = vld [vmem:[%s934 + $0x68] sm:%s924]
                %963 = vst [vmem:[%s935 + $0x68] sm:%s924] %v962
                %s964 = sadd.s32 1, %s933
                %p965 = scmp.ge.s32.totalorder %s964, %s925
                %s966 = scalar_select %p965, 0, %s964
                %s967 = smul.u32 %s966, 112
                %s968 = smul.u32 %s966, 112
                %s969 = scalar_lea.vmem %s904, %s967 [#allocation2]
                %s970 = scalar_lea.vmem %s915, %s968
              $region69: #{flowgnn_conv_block.3} parent=63 // loop_footer
                %s930 = sadd.s32 %s928, 1
              $region70: #{flowgnn_conv_block.3} parent=63 // loop_footer_branch
                %927 = sbr.rel target = $region66
              $region71: #{flowgnn_conv_block.3} parent=63 // loop_exit
                _
              %s971 = sdiv.u32.pop %s911, 14
              %s972 = srem.u32.pop %s911, 14
              %s973 = smul.u32 %s971, 14
              %s974 = smul.u32 8, %s973
              %s975 = scalar_lea.vmem %s904, %s974 [#allocation2]
              %s976 = smul.u32 8, %s973
              %s977 = scalar_lea.vmem %s915, %s976
              // While loop
              $region72: #{flowgnn_conv_block.3} parent=63 // loop_pre_header
                _
              $region73: #{flowgnn_conv_block.3} parent=63 // loop_header
                %s979 = sphi 0, %s981
                %p980 = scmp.ge.s32.totalorder %s979, %s972
                %s984 = sphi 0, %s991
                %s985 = sphi %s975, %s994
                %s986 = sphi %s977, %s995
              $region74: #{flowgnn_conv_block.3} parent=63 // loop_header_branch
                %983 = sbr.rel (%p980) target = $region78
              $region75: #{flowgnn_conv_block.3} parent=63 // loop_body
                %v987 = vld [vmem:[%s985] sm:%s924]
                %988 = vst [vmem:[%s986] sm:%s924] %v987
                %s989 = sadd.s32 1, %s984
                %p990 = scmp.ge.s32.totalorder %s989, %s972
                %s991 = scalar_select %p990, 0, %s989
                %s992 = smul.u32 %s991, 8
                %s993 = smul.u32 %s991, 8
                %s994 = scalar_lea.vmem %s975, %s992 [#allocation2]
                %s995 = scalar_lea.vmem %s977, %s993
              $region76: #{flowgnn_conv_block.3} parent=63 // loop_footer
                %s981 = sadd.s32 %s979, 1
              $region77: #{flowgnn_conv_block.3} parent=63 // loop_footer_branch
                %978 = sbr.rel target = $region73
              $region78: #{flowgnn_conv_block.3} parent=63 // loop_exit
                _
            $region64: #{flowgnn_conv_block.3} parent=55 // pred_fallthru
              _
          $region56: #{flowgnn_conv_block.3} parent=51 // pred_fallthru
            _
          %1071 = vnop
        $region52: #{flowgnn_conv_block.3} parent=47 // pred_fallthru
          _
      $region48: #{flowgnn_conv_block.3} parent=5 // pred_fallthru
        _
      %p1072 = scmp.le.s32.totalorder 2, %s13
      // Predicated region
      $region101: #{flowgnn_conv_block.3} parent=5 // pred_check
        %p1073 = pneg %p1072
      $region102: #{flowgnn_conv_block.3} parent=5 // pred_check_branch
        %1075 = sbr.rel (%p1073) target = $region104
      $region103: #{flowgnn_conv_block.3} parent=5 // pred_region
        %s1076 = ssub.s32 %s13, 2
        // Predicated region
        $region105: #{flowgnn_conv_block.3} parent=103 // pred_check
          %p1077 = pneg %p199
        $region106: #{flowgnn_conv_block.3} parent=103 // pred_check_branch
          %1079 = sbr.rel (%p1077) target = $region108
        $region107: #{flowgnn_conv_block.3} parent=103 // pred_region
          %s1080 = sand.u32 %s184, 1
          %s1081 = sand.u32 %s184, 1
          %s1082 = smul.addr %s1081, 112
          %s1083 = scalar_lea.vmem [#allocation2], %s1082
        $region108: #{flowgnn_conv_block.3} parent=103 // pred_fallthru
          _
      $region104: #{flowgnn_conv_block.3} parent=5 // pred_fallthru
        _
    $region6: #{flowgnn_conv_block.3} parent=1 // loop_footer
      %s17 = sadd.s32 1, %s13
    $region7: #{flowgnn_conv_block.3} parent=1 // loop_footer_branch
      %12 = sbr.rel target = $region3
    $region8: #{flowgnn_conv_block.3} parent=1 // loop_exit
      _

// kernel: flowgnn_conv_block.2
$region0: #{flowgnn_conv_block.2}
  #allocation0 [shape = 'u32[]', space=smem, size = 0x4, offset = 0x4, fixed_abs, tag = 'smem constant byte address 0x4 - core index']
  #allocation1 [shape = 'u32[144,128]{1,0:T(1,128)}', space=vmem, size = 0x12000, scoped, tag = 'internal scratch']
  %s0 = inlined_call_operand.vmem [shape: bf16[600,26], index: 0, kind: input, shape index: {}]
  %s1 = inlined_call_operand.vmem [shape: bf16[600,4], index: 1, kind: input, shape index: {}]
  %s2 = inlined_call_operand.vmem [shape: bf16[26,128], index: 2, kind: input, shape index: {}]
  %s3 = inlined_call_operand.vmem [shape: bf16[4,128], index: 3, kind: input, shape index: {}]
  %s4 = inlined_call_operand.vmem [shape: f32[1,128], index: 4, kind: input, shape index: {}]
  %s5 = inlined_call_operand.vmem [shape: bf16[128,16], index: 5, kind: input, shape index: {}]
  %s6 = inlined_call_operand.vmem [shape: f32[1,16], index: 6, kind: input, shape index: {}]
  %s7 = inlined_call_operand.vmem [shape: f32[600,16], index: 7, kind: output, shape index: {}]
  %s8 = sld [smem:[#allocation0]]
  $region109: #{flowgnn_conv_block.2} parent=0
    _
  %s10 = ssub.s32 1, %s8
  %s11 = scalar_select 0, %s10, %s8
  $region1: #{flowgnn_conv_block.2} parent=0
    #allocation2 [shape = 'u8[311296]{0}', space=vmem, size = 0x4c000, scoped, tag = 'output window, operand 0']
    loop: start=0, step=1, limit=4
    $region2: #{flowgnn_conv_block.2} parent=1 // loop_pre_header
      _
    $region3: #{flowgnn_conv_block.2} parent=1 // loop_header
      %s13 = sphi 0, %s17
      %p14 = scmp.ge.s32.totalorder %s13, 4
      %s23 = sphi 0, %s25
      %s26 = sphi 0, %s23
      %s27 = sphi 0, %s26
      %s43 = sphi 0, %s27
      %s49 = sphi 0, %s51
      %s52 = sphi 0, %s49
      %s53 = sphi 0, %s52
      %s69 = sphi 0, %s53
      %s73 = sphi 0, %s73
      %s75 = sphi 0, %s73
      %s76 = sphi 0, %s75
      %s90 = sphi 0, %s76
      %s94 = sphi 0, %s94
      %s96 = sphi 0, %s94
      %s97 = sphi 0, %s96
      %s111 = sphi 0, %s97
      %s115 = sphi 0, %s115
      %s117 = sphi 0, %s115
      %s118 = sphi 0, %s117
      %s132 = sphi 0, %s118
      %s136 = sphi 0, %s136
      %s138 = sphi 0, %s136
      %s139 = sphi 0, %s138
      %s153 = sphi 0, %s139
      %s157 = sphi 0, %s157
      %s159 = sphi 0, %s157
      %s160 = sphi 0, %s159
      %s174 = sphi 0, %s160
      %s180 = sphi 0, %s182
      %s183 = sphi 0, %s180
      %s184 = sphi 0, %s183
      %s200 = sphi 0, %s184
    $region4: #{flowgnn_conv_block.2} parent=1 // loop_header_branch
      %16 = sbr.rel (%p14) target = $region8
    $region5: #{flowgnn_conv_block.2} parent=1 // loop_body
      %s18 = ssub.s32 %s13, 1
      %s19 = ssub.s32 %s13, 2
      %s20 = sadd.s32 %s13, 1
      %s21 = ssub.s32 %s13, %s20
      %p22 = scmp.eq.s32.totalorder %s21, 0
      %s24 = sadd.s32 %s23, 1
      %s25 = scalar_select %p22, %s23, %s24
      %p28 = pneg %p22
      %p29 = scmp.eq.s32.totalorder %s13, 1
      %p30 = por %p28, %p29
      %p31 = scmp.ne.s32.totalorder %s23, %s26
      %p32 = scmp.eq.s32.totalorder %s13, 0
      %p33 = por %p31, %p32
      %p34 = scmp.ne.s32.totalorder %s23, %s26
      %p35 = scmp.eq.s32.totalorder %s18, 1
      %p36 = por %p34, %p35
      %p37 = scmp.ne.s32.totalorder %s26, %s27
      %p38 = scmp.eq.s32.totalorder %s18, 0
      %p39 = por %p37, %p38
      %p40 = scmp.ne.s32.totalorder %s26, %s27
      %p41 = scmp.eq.s32.totalorder %s19, 1
      %p42 = por %p40, %p41
      %p44 = scmp.ne.s32.totalorder %s27, %s43
      %p45 = scmp.eq.s32.totalorder %s19, 0
      %p46 = por %p44, %p45
      %s47 = ssub.s32 %s13, %s20
      %p48 = scmp.eq.s32.totalorder %s47, 0
      %s50 = sadd.s32 %s49, 1
      %s51 = scalar_select %p48, %s49, %s50
      %p54 = pneg %p48
      %p55 = scmp.eq.s32.totalorder %s13, 1
      %p56 = por %p54, %p55
      %p57 = scmp.ne.s32.totalorder %s49, %s52
      %p58 = scmp.eq.s32.totalorder %s13, 0
      %p59 = por %p57, %p58
      %p60 = scmp.ne.s32.totalorder %s49, %s52
      %p61 = scmp.eq.s32.totalorder %s18, 1
      %p62 = por %p60, %p61
      %p63 = scmp.ne.s32.totalorder %s52, %s53
      %p64 = scmp.eq.s32.totalorder %s18, 0
      %p65 = por %p63, %p64
      %p66 = scmp.ne.s32.totalorder %s52, %s53
      %p67 = scmp.eq.s32.totalorder %s19, 1
      %p68 = por %p66, %p67
      %p70 = scmp.ne.s32.totalorder %s53, %s69
      %p71 = scmp.eq.s32.totalorder %s19, 0
      %p72 = por %p70, %p71
      %s74 = sadd.s32 %s73, 1
      %p77 = scmp.eq.s32.totalorder %s13, 1
      %p78 = scmp.ne.s32.totalorder %s73, %s75
      %p79 = scmp.eq.s32.totalorder %s13, 0
      %p80 = por %p78, %p79
      %p81 = scmp.ne.s32.totalorder %s73, %s75
      %p82 = scmp.eq.s32.totalorder %s18, 1
      %p83 = por %p81, %p82
      %p84 = scmp.ne.s32.totalorder %s75, %s76
      %p85 = scmp.eq.s32.totalorder %s18, 0
      %p86 = por %p84, %p85
      %p87 = scmp.ne.s32.totalorder %s75, %s76
      %p88 = scmp.eq.s32.totalorder %s19, 1
      %p89 = por %p87, %p88
      %p91 = scmp.ne.s32.totalorder %s76, %s90
      %p92 = scmp.eq.s32.totalorder %s19, 0
      %p93 = por %p91, %p92
      %s95 = sadd.s32 %s94, 1
      %p98 = scmp.eq.s32.totalorder %s13, 1
      %p99 = scmp.ne.s32.totalorder %s94, %s96
      %p100 = scmp.eq.s32.totalorder %s13, 0
      %p101 = por %p99, %p100
      %p102 = scmp.ne.s32.totalorder %s94, %s96
      %p103 = scmp.eq.s32.totalorder %s18, 1
      %p104 = por %p102, %p103
      %p105 = scmp.ne.s32.totalorder %s96, %s97
      %p106 = scmp.eq.s32.totalorder %s18, 0
      %p107 = por %p105, %p106
      %p108 = scmp.ne.s32.totalorder %s96, %s97
      %p109 = scmp.eq.s32.totalorder %s19, 1
      %p110 = por %p108, %p109
      %p112 = scmp.ne.s32.totalorder %s97, %s111
      %p113 = scmp.eq.s32.totalorder %s19, 0
      %p114 = por %p112, %p113
      %s116 = sadd.s32 %s115, 1
      %p119 = scmp.eq.s32.totalorder %s13, 1
      %p120 = scmp.ne.s32.totalorder %s115, %s117
      %p121 = scmp.eq.s32.totalorder %s13, 0
      %p122 = por %p120, %p121
      %p123 = scmp.ne.s32.totalorder %s115, %s117
      %p124 = scmp.eq.s32.totalorder %s18, 1
      %p125 = por %p123, %p124
      %p126 = scmp.ne.s32.totalorder %s117, %s118
      %p127 = scmp.eq.s32.totalorder %s18, 0
      %p128 = por %p126, %p127
      %p129 = scmp.ne.s32.totalorder %s117, %s118
      %p130 = scmp.eq.s32.totalorder %s19, 1
      %p131 = por %p129, %p130
      %p133 = scmp.ne.s32.totalorder %s118, %s132
      %p134 = scmp.eq.s32.totalorder %s19, 0
      %p135 = por %p133, %p134
      %s137 = sadd.s32 %s136, 1
      %p140 = scmp.eq.s32.totalorder %s13, 1
      %p141 = scmp.ne.s32.totalorder %s136, %s138
      %p142 = scmp.eq.s32.totalorder %s13, 0
      %p143 = por %p141, %p142
      %p144 = scmp.ne.s32.totalorder %s136, %s138
      %p145 = scmp.eq.s32.totalorder %s18, 1
      %p146 = por %p144, %p145
      %p147 = scmp.ne.s32.totalorder %s138, %s139
      %p148 = scmp.eq.s32.totalorder %s18, 0
      %p149 = por %p147, %p148
      %p150 = scmp.ne.s32.totalorder %s138, %s139
      %p151 = scmp.eq.s32.totalorder %s19, 1
      %p152 = por %p150, %p151
      %p154 = scmp.ne.s32.totalorder %s139, %s153
      %p155 = scmp.eq.s32.totalorder %s19, 0
      %p156 = por %p154, %p155
      %s158 = sadd.s32 %s157, 1
      %p161 = scmp.eq.s32.totalorder %s13, 1
      %p162 = scmp.ne.s32.totalorder %s157, %s159
      %p163 = scmp.eq.s32.totalorder %s13, 0
      %p164 = por %p162, %p163
      %p165 = scmp.ne.s32.totalorder %s157, %s159
      %p166 = scmp.eq.s32.totalorder %s18, 1
      %p167 = por %p165, %p166
      %p168 = scmp.ne.s32.totalorder %s159, %s160
      %p169 = scmp.eq.s32.totalorder %s18, 0
      %p170 = por %p168, %p169
      %p171 = scmp.ne.s32.totalorder %s159, %s160
      %p172 = scmp.eq.s32.totalorder %s19, 1
      %p173 = por %p171, %p172
      %p175 = scmp.ne.s32.totalorder %s160, %s174
      %p176 = scmp.eq.s32.totalorder %s19, 0
      %p177 = por %p175, %p176
      %s178 = ssub.s32 %s13, %s20
      %p179 = scmp.eq.s32.totalorder %s178, 0
      %s181 = sadd.s32 %s180, 1
      %s182 = scalar_select %p179, %s180, %s181
      %p185 = pneg %p179
      %p186 = scmp.eq.s32.totalorder %s13, 1
      %p187 = por %p185, %p186
      %p188 = scmp.ne.s32.totalorder %s180, %s183
      %p189 = scmp.eq.s32.totalorder %s13, 0
      %p190 = por %p188, %p189
      %p191 = scmp.ne.s32.totalorder %s180, %s183
      %p192 = scmp.eq.s32.totalorder %s18, 1
      %p193 = por %p191, %p192
      %p194 = scmp.ne.s32.totalorder %s183, %s184
      %p195 = scmp.eq.s32.totalorder %s18, 0
      %p196 = por %p194, %p195
      %p197 = scmp.ne.s32.totalorder %s183, %s184
      %p198 = scmp.eq.s32.totalorder %s19, 1
      %p199 = por %p197, %p198
      %p201 = scmp.ne.s32.totalorder %s184, %s200
      %p202 = scmp.eq.s32.totalorder %s19, 0
      %p203 = por %p201, %p202
      %p204 = scmp.le.s32.totalorder 1, %s13
      %p205 = scmp.lt.s32.totalorder %s13, 3
      %p206 = pnand %p204, %p205
      %p207 = pneg %p206
      // Predicated region
      $region9: #{flowgnn_conv_block.2} parent=5 // pred_check
        _
      $region10: #{flowgnn_conv_block.2} parent=5 // pred_check_branch
        %209 = sbr.rel (%p206) target = $region12
      $region11: #{flowgnn_conv_block.2} parent=5 // pred_region
        %s210 = ssub.s32 %s13, 1
        // Predicated region
        $region13: #{flowgnn_conv_block.2} parent=11 // pred_check
          %p211 = pneg %p86
        $region14: #{flowgnn_conv_block.2} parent=11 // pred_check_branch
          %213 = sbr.rel (%p211) target = $region16
        $region15: #{flowgnn_conv_block.2} parent=11 // pred_region
          _
        $region16: #{flowgnn_conv_block.2} parent=11 // pred_fallthru
          _
        // Predicated region
        $region17: #{flowgnn_conv_block.2} parent=11 // pred_check
          %p214 = pneg %p107
        $region18: #{flowgnn_conv_block.2} parent=11 // pred_check_branch
          %216 = sbr.rel (%p214) target = $region20
        $region19: #{flowgnn_conv_block.2} parent=11 // pred_region
          _
        $region20: #{flowgnn_conv_block.2} parent=11 // pred_fallthru
          _
        // Predicated region
        $region21: #{flowgnn_conv_block.2} parent=11 // pred_check
          %p217 = pneg %p128
        $region22: #{flowgnn_conv_block.2} parent=11 // pred_check_branch
          %219 = sbr.rel (%p217) target = $region24
        $region23: #{flowgnn_conv_block.2} parent=11 // pred_region
          _
        $region24: #{flowgnn_conv_block.2} parent=11 // pred_fallthru
          _
        // Predicated region
        $region25: #{flowgnn_conv_block.2} parent=11 // pred_check
          %p220 = pneg %p149
        $region26: #{flowgnn_conv_block.2} parent=11 // pred_check_branch
          %222 = sbr.rel (%p220) target = $region28
        $region27: #{flowgnn_conv_block.2} parent=11 // pred_region
          _
        $region28: #{flowgnn_conv_block.2} parent=11 // pred_fallthru
          _
        // Predicated region
        $region29: #{flowgnn_conv_block.2} parent=11 // pred_check
          %p223 = pneg %p170
        $region30: #{flowgnn_conv_block.2} parent=11 // pred_check_branch
          %225 = sbr.rel (%p223) target = $region32
        $region31: #{flowgnn_conv_block.2} parent=11 // pred_region
          _
        $region32: #{flowgnn_conv_block.2} parent=11 // pred_fallthru
          _
      $region12: #{flowgnn_conv_block.2} parent=5 // pred_fallthru
        _
      %p226 = scmp.lt.s32.totalorder %s13, 2
      // Predicated region
      $region33: #{flowgnn_conv_block.2} parent=5 // pred_check
        %p227 = pneg %p226
      $region34: #{flowgnn_conv_block.2} parent=5 // pred_check_branch
        %229 = sbr.rel (%p227) target = $region36
      $region35: #{flowgnn_conv_block.2} parent=5 // pred_region
        // Predicated region
        $region37: #{flowgnn_conv_block.2} parent=35 // pred_check
          %p230 = pneg %p33
        $region38: #{flowgnn_conv_block.2} parent=35 // pred_check_branch
          %232 = sbr.rel (%p230) target = $region40
        $region39: #{flowgnn_conv_block.2} parent=35 // pred_region
          %s233 = smul.u32 38, %s13
          %s234 = ssub.s32 75, %s233
          %p235 = scmp.lt.s32.totalorder %s234, 38
          %s236 = scalar_select %p235, %s234, 38
          %s237 = smul.u32 64, %s236
          %p238 = scmp.lt.s32.totalorder %s233, 74
          %s239 = scalar_select %p238, %s233, 74
          %s240 = smul.addr %s239, 4
          %s241 = scalar_lea.vmem %s0, %s240
          %s242 = smul.u32 38, %s13
          %s243 = ssub.s32 75, %s242
          %p244 = scmp.lt.s32.totalorder %s243, 38
          %s245 = scalar_select %p244, %s243, 38
          %s246 = smul.u32 64, %s245
        $region40: #{flowgnn_conv_block.2} parent=35 // pred_fallthru
          _
        // Predicated region
        $region41: #{flowgnn_conv_block.2} parent=35 // pred_check
          %p247 = pneg %p59
        $region42: #{flowgnn_conv_block.2} parent=35 // pred_check_branch
          %249 = sbr.rel (%p247) target = $region44
        $region43: #{flowgnn_conv_block.2} parent=35 // pred_region
          %s250 = smul.u32 38, %s13
          %s251 = ssub.s32 75, %s250
          %p252 = scmp.lt.s32.totalorder %s251, 38
          %s253 = scalar_select %p252, %s251, 38
          %s254 = smul.u32 64, %s253
          %p255 = scmp.lt.s32.totalorder %s250, 74
          %s256 = scalar_select %p255, %s250, 74
          %s257 = smul.addr %s256, 4
          %s258 = scalar_lea.vmem %s1, %s257
          %s259 = smul.u32 38, %s13
          %s260 = ssub.s32 75, %s259
          %p261 = scmp.lt.s32.totalorder %s260, 38
          %s262 = scalar_select %p261, %s260, 38
          %s263 = smul.u32 64, %s262
        $region44: #{flowgnn_conv_block.2} parent=35 // pred_fallthru
          _
      $region36: #{flowgnn_conv_block.2} parent=5 // pred_fallthru
        _
      %p264 = scmp.le.s32.totalorder 1, %s13
      %p265 = scmp.lt.s32.totalorder %s13, 3
      %p266 = pnand %p264, %p265
      %p267 = pneg %p266
      // Predicated region
      $region45: #{flowgnn_conv_block.2} parent=5 // pred_check
        _
      $region46: #{flowgnn_conv_block.2} parent=5 // pred_check_branch
        %269 = sbr.rel (%p266) target = $region48
      $region47: #{flowgnn_conv_block.2} parent=5 // pred_region
        %s270 = ssub.s32 %s13, 1
        %s271 = smul.u32 38, %s18
        %s272 = ssub.s32 75, %s271
        %p273 = scmp.lt.s32.totalorder %s272, 38
        %s274 = scalar_select %p273, %s272, 38
        %s275 = smul.u32 64, %s274
        %p276 = scmp.lt.s32.totalorder %s271, 74
        %s277 = scalar_select %p276, %s271, 74
        %s278 = smul.addr %s277, 4
        %s279 = scalar_lea.vmem %s0, %s278
        %p280 = pneg %p39
        %p281 = pneg %p36
        %s282 = smul.u32 38, %s18
        %s283 = ssub.s32 75, %s282
        %p284 = scmp.lt.s32.totalorder %s283, 38
        %s285 = scalar_select %p284, %s283, 38
        %s286 = smul.u32 64, %s285
        %p287 = scmp.lt.s32.totalorder %s282, 74
        %s288 = scalar_select %p287, %s282, 74
        %s289 = smul.addr %s288, 4
        %s290 = scalar_lea.vmem %s1, %s289
        %p291 = pneg %p65
        %p292 = pneg %p62
        %p293 = pneg %p86
        %p294 = pneg %p83
        %p295 = pneg %p107
        %p296 = pneg %p104
        %p297 = pneg %p128
        %p298 = pneg %p125
        %p299 = pneg %p149
        %p300 = pneg %p146
        %p301 = pneg %p170
        %p302 = pneg %p167
        %p303 = pneg %p196
        %p304 = pneg %p193
        %s305 = sand.u32 %s183, 1
        %s306 = sand.u32 %s183, 1
        %s307 = smul.addr %s306, 304
        %s308 = scalar_lea.vmem [#allocation2], %s307
        %s309 = smul.u32 38, %s18
        %s310 = ssub.s32 75, %s309
        %p311 = scmp.lt.s32.totalorder %s310, 38
        %s312 = scalar_select %p311, %s310, 38
        %s313 = smul.u32 64, %s312
        %p314 = scmp.lt.s32.totalorder %s309, 74
        %s315 = scalar_select %p314, %s309, 74
        %s316 = smul.addr %s315, 4
        %s317 = scalar_lea.vmem %s0, %s316
        %s318 = smul.u32 38, %s18
        %s319 = ssub.s32 75, %s318
        %p320 = scmp.lt.s32.totalorder %s319, 38
        %s321 = scalar_select %p320, %s319, 38
        %s322 = smul.u32 64, %s321
        %s323 = smul.u32 38, %s18
        %s324 = ssub.s32 75, %s323
        %p325 = scmp.lt.s32.totalorder %s324, 38
        %s326 = scalar_select %p325, %s324, 38
        %s327 = smul.u32 64, %s326
        %p328 = scmp.lt.s32.totalorder %s323, 74
        %s329 = scalar_select %p328, %s323, 74
        %s330 = smul.addr %s329, 4
        %s331 = scalar_lea.vmem %s1, %s330
        %s332 = smul.u32 38, %s18
        %s333 = ssub.s32 75, %s332
        %p334 = scmp.lt.s32.totalorder %s333, 38
        %s335 = scalar_select %p334, %s333, 38
        %s336 = smul.u32 64, %s335
        %s337 = smul.u32 38, %s18
        %s338 = ssub.s32 75, %s337
        %p339 = scmp.lt.s32.totalorder %s338, 38
        %s340 = scalar_select %p339, %s338, 38
        %s341 = smul.u32 128, %s340
        %v343 = vld [vmem:[%s317] sm:$0xf]
        %v344 = vld [vmem:[%s317 + $0x4] sm:$0xf]
        %v345 = vld [vmem:[%s317 + $0x8] sm:$0xf]
        %v346 = vld [vmem:[%s317 + $0xc] sm:$0xf]
        %v347 = vld [vmem:[%s317 + $0x10] sm:$0xf]
        %v348 = vld [vmem:[%s317 + $0x14] sm:$0xf]
        %v349 = vld [vmem:[%s317 + $0x18] sm:$0xf]
        %v350 = vld [vmem:[%s317 + $0x1c] sm:$0xf]
        %v351 = vld [vmem:[%s317 + $0x20] sm:$0xf]
        %v352 = vld [vmem:[%s317 + $0x24] sm:$0xf]
        %v353 = vld [vmem:[%s317 + $0x28] sm:$0xf]
        %v354 = vld [vmem:[%s317 + $0x2c] sm:$0xf]
        %v355 = vld [vmem:[%s317 + $0x30] sm:$0xf]
        %v356 = vld [vmem:[%s317 + $0x34] sm:$0xf]
        %v357 = vld [vmem:[%s317 + $0x38] sm:$0xf]
        %v358 = vld [vmem:[%s317 + $0x3c] sm:$0xf]
        %v359 = vld [vmem:[%s317 + $0x40] sm:$0xf]
        %v360 = vld [vmem:[%s317 + $0x44] sm:$0xf]
        %v361 = vld [vmem:[%s317 + $0x48] sm:$0xf]
        %v362 = vld [vmem:[%s317 + $0x4c] sm:$0xf]
        %v363 = vld [vmem:[%s317 + $0x50] sm:$0xf]
        %v364 = vld [vmem:[%s317 + $0x54] sm:$0xf]
        %v365 = vld [vmem:[%s317 + $0x58] sm:$0xf]
        %v366 = vld [vmem:[%s317 + $0x5c] sm:$0xf]
        %v367 = vld [vmem:[%s317 + $0x60] sm:$0xf]
        %v368 = vld [vmem:[%s317 + $0x64] sm:$0xf]
        %v369 = vld [vmem:[%s317 + $0x68] sm:$0xf]
        %v370 = vld [vmem:[%s317 + $0x6c] sm:$0xf]
        %v371 = vld [vmem:[%s317 + $0x70] sm:$0xf]
        %v372 = vld [vmem:[%s317 + $0x74] sm:$0xf]
        %v373 = vld [vmem:[%s317 + $0x78] sm:$0xf]
        %v374 = vld [vmem:[%s317 + $0x7c] sm:$0xf]
        %v375 = vld [vmem:[%s317 + $0x80] sm:$0xf]
        %v376 = vld [vmem:[%s317 + $0x84] sm:$0xf]
        %v377 = vld [vmem:[%s317 + $0x88] sm:$0xf]
        %v378 = vld [vmem:[%s317 + $0x8c] sm:$0xf]
        %v379 = vld [vmem:[%s317 + $0x90] sm:$0xf]
        %v380 = vld [vmem:[%s317 + $0x94] sm:$0xf]
        %v381 = vld [vmem:[%s2] sm:$0xf]
        %v382 = vld [vmem:[%s2 + $0x4] sm:$0xf]
        %v383 = vld [vmem:[%s2 + $0x8] sm:$0xf]
        %v384 = vld [vmem:[%s2 + $0xc] sm:$0x1]
        %v385 = vld [vmem:[%s331] sm:$0xf]
        %v386 = vld [vmem:[%s331 + $0x4] sm:$0xf]
        %v387 = vld [vmem:[%s331 + $0x8] sm:$0xf]
        %v388 = vld [vmem:[%s331 + $0xc] sm:$0xf]
        %v389 = vld [vmem:[%s331 + $0x10] sm:$0xf]
        %v390 = vld [vmem:[%s331 + $0x14] sm:$0xf]
        %v391 = vld [vmem:[%s331 + $0x18] sm:$0xf]
        %v392 = vld [vmem:[%s331 + $0x1c] sm:$0xf]
        %v393 = vld [vmem:[%s331 + $0x20] sm:$0xf]
        %v394 = vld [vmem:[%s331 + $0x24] sm:$0xf]
        %v395 = vld [vmem:[%s331 + $0x28] sm:$0xf]
        %v396 = vld [vmem:[%s331 + $0x2c] sm:$0xf]
        %v397 = vld [vmem:[%s331 + $0x30] sm:$0xf]
        %v398 = vld [vmem:[%s331 + $0x34] sm:$0xf]
        %v399 = vld [vmem:[%s331 + $0x38] sm:$0xf]
        %v400 = vld [vmem:[%s331 + $0x3c] sm:$0xf]
        %v401 = vld [vmem:[%s331 + $0x40] sm:$0xf]
        %v402 = vld [vmem:[%s331 + $0x44] sm:$0xf]
        %v403 = vld [vmem:[%s331 + $0x48] sm:$0xf]
        %v404 = vld [vmem:[%s331 + $0x4c] sm:$0xf]
        %v405 = vld [vmem:[%s331 + $0x50] sm:$0xf]
        %v406 = vld [vmem:[%s331 + $0x54] sm:$0xf]
        %v407 = vld [vmem:[%s331 + $0x58] sm:$0xf]
        %v408 = vld [vmem:[%s331 + $0x5c] sm:$0xf]
        %v409 = vld [vmem:[%s331 + $0x60] sm:$0xf]
        %v410 = vld [vmem:[%s331 + $0x64] sm:$0xf]
        %v411 = vld [vmem:[%s331 + $0x68] sm:$0xf]
        %v412 = vld [vmem:[%s331 + $0x6c] sm:$0xf]
        %v413 = vld [vmem:[%s331 + $0x70] sm:$0xf]
        %v414 = vld [vmem:[%s331 + $0x74] sm:$0xf]
        %v415 = vld [vmem:[%s331 + $0x78] sm:$0xf]
        %v416 = vld [vmem:[%s331 + $0x7c] sm:$0xf]
        %v417 = vld [vmem:[%s331 + $0x80] sm:$0xf]
        %v418 = vld [vmem:[%s331 + $0x84] sm:$0xf]
        %v419 = vld [vmem:[%s331 + $0x88] sm:$0xf]
        %v420 = vld [vmem:[%s331 + $0x8c] sm:$0xf]
        %v421 = vld [vmem:[%s331 + $0x90] sm:$0xf]
        %v422 = vld [vmem:[%s331 + $0x94] sm:$0xf]
        %v423 = vld [vmem:[%s3] sm:$0x3]
        %v462 = vunpack.c.l.b16 %v385
        %v463 = vunpack.c.l.b16 %v386
        %v464 = vunpack.c.l.b16 %v387
        %v465 = vunpack.c.l.b16 %v388
        %v466 = vunpack.c.l.b16 %v389
        %v467 = vunpack.c.l.b16 %v390
        %v468 = vunpack.c.l.b16 %v391
        %v469 = vunpack.c.l.b16 %v392
        %v470 = vunpack.c.l.b16 %v393
        %v471 = vunpack.c.l.b16 %v394
        %v472 = vunpack.c.l.b16 %v395
        %v473 = vunpack.c.l.b16 %v396
        %v474 = vunpack.c.l.b16 %v397
        %v475 = vunpack.c.l.b16 %v398
        %v476 = vunpack.c.l.b16 %v399
        %v477 = vunpack.c.l.b16 %v400
        %v478 = vunpack.c.l.b16 %v401
        %v479 = vunpack.c.l.b16 %v402
        %v480 = vunpack.c.l.b16 %v403
        %v481 = vunpack.c.l.b16 %v404
        %v482 = vunpack.c.l.b16 %v405
        %v483 = vunpack.c.l.b16 %v406
        %v484 = vunpack.c.l.b16 %v407
        %v485 = vunpack.c.l.b16 %v408
        %v486 = vunpack.c.l.b16 %v409
        %v487 = vunpack.c.l.b16 %v410
        %v488 = vunpack.c.l.b16 %v411
        %v489 = vunpack.c.l.b16 %v412
        %v490 = vunpack.c.l.b16 %v413
        %v491 = vunpack.c.l.b16 %v414
        %v492 = vunpack.c.l.b16 %v415
        %v493 = vunpack.c.l.b16 %v416
        %v494 = vunpack.c.l.b16 %v417
        %v495 = vunpack.c.l.b16 %v418
        %v496 = vunpack.c.l.b16 %v419
        %v497 = vunpack.c.l.b16 %v420
        %v498 = vunpack.c.l.b16 %v421
        %v499 = vunpack.c.l.b16 %v422
        %v500 = vpack.c.b16 %v463, %v462
        %v501 = vpack.c.b16 %v465, %v464
        %v502 = vpack.c.b16 %v467, %v466
        %v503 = vpack.c.b16 %v469, %v468
        %v504 = vpack.c.b16 %v471, %v470
        %v505 = vpack.c.b16 %v473, %v472
        %v506 = vpack.c.b16 %v475, %v474
        %v507 = vpack.c.b16 %v477, %v476
        %v508 = vpack.c.b16 %v479, %v478
        %v509 = vpack.c.b16 %v481, %v480
        %v510 = vpack.c.b16 %v483, %v482
        %v511 = vpack.c.b16 %v485, %v484
        %v512 = vpack.c.b16 %v487, %v486
        %v513 = vpack.c.b16 %v489, %v488
        %v514 = vpack.c.b16 %v491, %v490
        %v515 = vpack.c.b16 %v493, %v492
        %v516 = vpack.c.b16 %v495, %v494
        %v517 = vpack.c.b16 %v497, %v496
        %v518 = vpack.c.b16 %v499, %v498
        %vm519 = vcmask 31744
        %v521 = vsel %vm519, %v500, 0
        %v524 = vsel %vm519, %v501, 0
        %v527 = vsel %vm519, %v502, 0
        %v530 = vsel %vm519, %v503, 0
        %v533 = vsel %vm519, %v504, 0
        %v536 = vsel %vm519, %v505, 0
        %v539 = vsel %vm519, %v506, 0
        %v542 = vsel %vm519, %v507, 0
        %v545 = vsel %vm519, %v508, 0
        %v548 = vsel %vm519, %v509, 0
        %v551 = vsel %vm519, %v510, 0
        %v554 = vsel %vm519, %v511, 0
        %v557 = vsel %vm519, %v512, 0
        %v560 = vsel %vm519, %v513, 0
        %v563 = vsel %vm519, %v514, 0
        %v566 = vsel %vm519, %v515, 0
        %v569 = vsel %vm519, %v516, 0
        %v572 = vsel %vm519, %v517, 0
        %v575 = vsel %vm519, %v518, 0
        %vm577 = vcmask 1041408
        %v579 = vsel %vm577, %v423, 0
        %581 = vmatprep.subr.bf16.mxu0 0
        %582 = vmatpush1.bf16.msra.mxu0 0
        %583 = vmatprep.subr.bf16.mxu0 0
        %584 = vmatpush1.bf16.msra.mxu0 0
        %585 = vmatprep.subr.bf16.mxu0 0
        %586 = vmatpush1.bf16.msra.mxu0 0
        %587 = vmatprep.subr.bf16.mxu0 0
        %588 = vmatpush1.bf16.msra.mxu0 0
        %589 = vmatprep.subr.bf16.mxu0 0
        %590 = vmatpush1.bf16.msra.mxu0 0
        %591 = vmatprep.subr.bf16.mxu0 0
        %592 = vmatpush1.bf16.msra.mxu0 0
        %593 = vmatprep.subr.bf16.mxu0 0
        %594 = vmatpush1.bf16.msra.mxu0 0
        %595 = vmatprep.subr.bf16.mxu0 0
        %596 = vmatpush1.bf16.msra.mxu0 %v579
        %597 = vmatprep.subr.bf16.mxu0 0
        %598 = vmatpush2.bf16.msra.mxu0 0
        %599 = vmatprep.subr.bf16.mxu0 0
        %600 = vmatpush2.bf16.msra.mxu0 0
        %601 = vmatprep.subr.bf16.mxu0 0
        %602 = vmatpush2.bf16.msra.mxu0 0
        %603 = vmatprep.subr.bf16.mxu0 0
        %604 = vmatpush2.bf16.msra.mxu0 0
        %605 = vmatprep.subr.bf16.mxu0 0
        %606 = vmatpush2.bf16.msra.mxu0 0
        %607 = vmatprep.subr.bf16.mxu0 0
        %608 = vmatpush2.bf16.msra.mxu0 0
        %609 = vmatprep.subr.bf16.mxu0 0
        %610 = vmatpush2.bf16.msra.mxu0 0
        %611 = vmatprep.subr.bf16.mxu0 0
        %612 = vmatpush2.bf16.msra.mxu0 0
        %613 = vmatprep.mubr.bf16.mxu0 0
        %614 = vmatmul.mubr.bf16.gmra.mxu0 %v521
        %v615 = vpop.f32.mrf.mxu0
        %v616 = vadd.f32 0.0, %v615
        %v617 = vpop.f32.mrf.mxu0
        %v618 = vpop.f32.mrf.mxu0
        %v619 = vadd.f32 0.0, %v618
        %v620 = vpop.f32.mrf.mxu0
        %621 = vmatprep.mubr.bf16.mxu0 0
        %622 = vmatmul.mubr.bf16.gmra.mxu0 %v524
        %v623 = vpop.f32.mrf.mxu0
        %v624 = vadd.f32 0.0, %v623
        %v625 = vpop.f32.mrf.mxu0
        %v626 = vpop.f32.mrf.mxu0
        %v627 = vadd.f32 0.0, %v626
        %v628 = vpop.f32.mrf.mxu0
        %629 = vmatprep.mubr.bf16.mxu0 0
        %630 = vmatmul.mubr.bf16.gmra.mxu0 %v527
        %v631 = vpop.f32.mrf.mxu0
        %v632 = vadd.f32 0.0, %v631
        %v633 = vpop.f32.mrf.mxu0
        %v634 = vpop.f32.mrf.mxu0
        %v635 = vadd.f32 0.0, %v634
        %v636 = vpop.f32.mrf.mxu0
        %637 = vmatprep.mubr.bf16.mxu0 0
        %638 = vmatmul.mubr.bf16.gmra.mxu0 %v530
        %v639 = vpop.f32.mrf.mxu0
        %v640 = vadd.f32 0.0, %v639
        %v641 = vpop.f32.mrf.mxu0
        %v642 = vpop.f32.mrf.mxu0
        %v643 = vadd.f32 0.0, %v642
        %v644 = vpop.f32.mrf.mxu0
        %645 = vmatprep.mubr.bf16.mxu0 0
        %646 = vmatmul.mubr.bf16.gmra.mxu0 %v533
        %v647 = vpop.f32.mrf.mxu0
        %v648 = vadd.f32 0.0, %v647
        %v649 = vpop.f32.mrf.mxu0
        %v650 = vpop.f32.mrf.mxu0
        %v651 = vadd.f32 0.0, %v650
        %v652 = vpop.f32.mrf.mxu0
        %653 = vmatprep.mubr.bf16.mxu0 0
        %654 = vmatmul.mubr.bf16.gmra.mxu0 %v536
        %v655 = vpop.f32.mrf.mxu0
        %v656 = vadd.f32 0.0, %v655
        %v657 = vpop.f32.mrf.mxu0
        %v658 = vpop.f32.mrf.mxu0
        %v659 = vadd.f32 0.0, %v658
        %v660 = vpop.f32.mrf.mxu0
        %661 = vmatprep.mubr.bf16.mxu0 0
        %662 = vmatmul.mubr.bf16.gmra.mxu0 %v539
        %v663 = vpop.f32.mrf.mxu0
        %v664 = vadd.f32 0.0, %v663
        %v665 = vpop.f32.mrf.mxu0
        %v666 = vpop.f32.mrf.mxu0
        %v667 = vadd.f32 0.0, %v666
        %v668 = vpop.f32.mrf.mxu0
        %669 = vmatprep.mubr.bf16.mxu0 0
        %670 = vmatmul.mubr.bf16.gmra.mxu0 %v542
        %v671 = vpop.f32.mrf.mxu0
        %v672 = vadd.f32 0.0, %v671
        %v673 = vpop.f32.mrf.mxu0
        %v674 = vpop.f32.mrf.mxu0
        %v675 = vadd.f32 0.0, %v674
        %v676 = vpop.f32.mrf.mxu0
        %677 = vmatprep.mubr.bf16.mxu0 0
        %678 = vmatmul.mubr.bf16.gmra.mxu0 %v545
        %v679 = vpop.f32.mrf.mxu0
        %v680 = vadd.f32 0.0, %v679
        %v681 = vpop.f32.mrf.mxu0
        %v682 = vpop.f32.mrf.mxu0
        %v683 = vadd.f32 0.0, %v682
        %v684 = vpop.f32.mrf.mxu0
        %685 = vmatprep.mubr.bf16.mxu0 0
        %686 = vmatmul.mubr.bf16.gmra.mxu0 %v548
        %v687 = vpop.f32.mrf.mxu0
        %v688 = vadd.f32 0.0, %v687
        %v689 = vpop.f32.mrf.mxu0
        %v690 = vpop.f32.mrf.mxu0
        %v691 = vadd.f32 0.0, %v690
        %v692 = vpop.f32.mrf.mxu0
        %693 = vmatprep.mubr.bf16.mxu0 0
        %694 = vmatmul.mubr.bf16.gmra.mxu0 %v551
        %v695 = vpop.f32.mrf.mxu0
        %v696 = vadd.f32 0.0, %v695
        %v697 = vpop.f32.mrf.mxu0
        %v698 = vpop.f32.mrf.mxu0
        %v699 = vadd.f32 0.0, %v698
        %v700 = vpop.f32.mrf.mxu0
        %701 = vmatprep.mubr.bf16.mxu0 0
        %702 = vmatmul.mubr.bf16.gmra.mxu0 %v554
        %v703 = vpop.f32.mrf.mxu0
        %v704 = vadd.f32 0.0, %v703
        %v705 = vpop.f32.mrf.mxu0
        %v706 = vpop.f32.mrf.mxu0
        %v707 = vadd.f32 0.0, %v706
        %v708 = vpop.f32.mrf.mxu0
        %709 = vmatprep.mubr.bf16.mxu0 0
        %710 = vmatmul.mubr.bf16.gmra.mxu0 %v557
        %v711 = vpop.f32.mrf.mxu0
        %v712 = vadd.f32 0.0, %v711
        %v713 = vpop.f32.mrf.mxu0
        %v714 = vpop.f32.mrf.mxu0
        %v715 = vadd.f32 0.0, %v714
        %v716 = vpop.f32.mrf.mxu0
        %717 = vmatprep.mubr.bf16.mxu0 0
        %718 = vmatmul.mubr.bf16.gmra.mxu0 %v560
        %v719 = vpop.f32.mrf.mxu0
        %v720 = vadd.f32 0.0, %v719
        %v721 = vpop.f32.mrf.mxu0
        %v722 = vpop.f32.mrf.mxu0
        %v723 = vadd.f32 0.0, %v722
        %v724 = vpop.f32.mrf.mxu0
        %725 = vmatprep.mubr.bf16.mxu0 0
        %726 = vmatmul.mubr.bf16.gmra.mxu0 %v563
        %v727 = vpop.f32.mrf.mxu0
        %v728 = vadd.f32 0.0, %v727
        %v729 = vpop.f32.mrf.mxu0
        %v730 = vpop.f32.mrf.mxu0
        %v731 = vadd.f32 0.0, %v730
        %v732 = vpop.f32.mrf.mxu0
        %733 = vmatprep.mubr.bf16.mxu0 0
        %734 = vmatmul.mubr.bf16.gmra.mxu0 %v566
        %v735 = vpop.f32.mrf.mxu0
        %v736 = vadd.f32 0.0, %v735
        %v737 = vpop.f32.mrf.mxu0
        %v738 = vpop.f32.mrf.mxu0
        %v739 = vadd.f32 0.0, %v738
        %v740 = vpop.f32.mrf.mxu0
        %741 = vmatprep.mubr.bf16.mxu0 0
        %742 = vmatmul.mubr.bf16.gmra.mxu0 %v569
        %v743 = vpop.f32.mrf.mxu0
        %v744 = vadd.f32 0.0, %v743
        %v745 = vpop.f32.mrf.mxu0
        %v746 = vpop.f32.mrf.mxu0
        %v747 = vadd.f32 0.0, %v746
        %v748 = vpop.f32.mrf.mxu0
        %749 = vmatprep.mubr.bf16.mxu0 0
        %750 = vmatmul.mubr.bf16.gmra.mxu0 %v572
        %v751 = vpop.f32.mrf.mxu0
        %v752 = vadd.f32 0.0, %v751
        %v753 = vpop.f32.mrf.mxu0
        %v754 = vpop.f32.mrf.mxu0
        %v755 = vadd.f32 0.0, %v754
        %v756 = vpop.f32.mrf.mxu0
        %757 = vmatprep.mubr.bf16.mxu0 0
        %758 = vmatmul.mubr.bf16.gmra.mxu0 %v575
        %v759 = vpop.f32.mrf.mxu0
        %v760 = vadd.f32 0.0, %v759
        %v761 = vpop.f32.mrf.mxu0
        %v762 = vpop.f32.mrf.mxu0
        %v763 = vadd.f32 0.0, %v762
        %v764 = vpop.f32.mrf.mxu0
        %765 = vdwg.mxu0
        %v804 = vunpack.c.l.b16 %v343
        %v805 = vunpack.c.l.b16 %v344
        %v806 = vunpack.c.l.b16 %v345
        %v807 = vunpack.c.l.b16 %v346
        %v808 = vunpack.c.l.b16 %v347
        %v809 = vunpack.c.l.b16 %v348
        %v810 = vunpack.c.l.b16 %v349
        %v811 = vunpack.c.l.b16 %v350
        %v812 = vunpack.c.l.b16 %v351
        %v813 = vunpack.c.l.b16 %v352
        %v814 = vunpack.c.l.b16 %v353
        %v815 = vunpack.c.l.b16 %v354
        %v816 = vunpack.c.l.b16 %v355
        %v817 = vunpack.c.l.b16 %v356
        %v818 = vunpack.c.l.b16 %v357
        %v819 = vunpack.c.l.b16 %v358
        %v820 = vunpack.c.l.b16 %v359
        %v821 = vunpack.c.l.b16 %v360
        %v822 = vunpack.c.l.b16 %v361
        %v823 = vunpack.c.l.b16 %v362
        %v824 = vunpack.c.l.b16 %v363
        %v825 = vunpack.c.l.b16 %v364
        %v826 = vunpack.c.l.b16 %v365
        %v827 = vunpack.c.l.b16 %v366
        %v828 = vunpack.c.l.b16 %v367
        %v829 = vunpack.c.l.b16 %v368
        %v830 = vunpack.c.l.b16 %v369
        %v831 = vunpack.c.l.b16 %v370
        %v832 = vunpack.c.l.b16 %v371
        %v833 = vunpack.c.l.b16 %v372
        %v834 = vunpack.c.l.b16 %v373
        %v835 = vunpack.c.l.b16 %v374
        %v836 = vunpack.c.l.b16 %v375
        %v837 = vunpack.c.l.b16 %v376
        %v838 = vunpack.c.l.b16 %v377
        %v839 = vunpack.c.l.b16 %v378
        %v840 = vunpack.c.l.b16 %v379
        %v841 = vunpack.c.l.b16 %v380
        %v842 = vpack.c.b16 %v805, %v804
        %v843 = vpack.c.b16 %v807, %v806
        %v844 = vpack.c.b16 %v809, %v808
        %v845 = vpack.c.b16 %v811, %v810
        %v846 = vpack.c.b16 %v813, %v812
        %v847 = vpack.c.b16 %v815, %v814
        %v848 = vpack.c.b16 %v817, %v816
        %v849 = vpack.c.b16 %v819, %v818
        %v850 = vpack.c.b16 %v821, %v820
        %v851 = vpack.c.b16 %v823, %v822
        %v852 = vpack.c.b16 %v825, %v824
        %v853 = vpack.c.b16 %v827, %v826
        %v854 = vpack.c.b16 %v829, %v828
        %v855 = vpack.c.b16 %v831, %v830
        %v856 = vpack.c.b16 %v833, %v832
        %v857 = vpack.c.b16 %v835, %v834
        %v858 = vpack.c.b16 %v837, %v836
        %v859 = vpack.c.b16 %v839, %v838
        %v860 = vpack.c.b16 %v841, %v840
        %v865 = vunpack.c.l.b16 %v381
        %v866 = vunpack.c.l.b16 %v382
        %v867 = vunpack.c.l.b16 %v383
        %v868 = vunpack.c.l.b16 %v384
        %v869 = vpack.c.b16 %v866, %v865
        %v870 = vpack.c.b16 %v868, %v867
        %vm872 = vcmask 211968
        %v874 = vsel %vm872, %v842, 0
        %v877 = vsel %vm872, %v843, 0
        %v880 = vsel %vm872, %v844, 0
        %v883 = vsel %vm872, %v845, 0
        %v886 = vsel %vm872, %v846, 0
        %v889 = vsel %vm872, %v847, 0
        %v892 = vsel %vm872, %v848, 0
        %v895 = vsel %vm872, %v849, 0
        %v898 = vsel %vm872, %v850, 0
        %v901 = vsel %vm872, %v851, 0
        %v904 = vsel %vm872, %v852, 0
        %v907 = vsel %vm872, %v853, 0
        %v910 = vsel %vm872, %v854, 0
        %v913 = vsel %vm872, %v855, 0
        %v916 = vsel %vm872, %v856, 0
        %v919 = vsel %vm872, %v857, 0
        %v922 = vsel %vm872, %v858, 0
        %v925 = vsel %vm872, %v859, 0
        %v928 = vsel %vm872, %v860, 0
        %vm930 = vcmask 1044480
        %v932 = vsel %vm930, %v870, 0
        %934 = vmatprep.subr.bf16.mxu0 0
        %935 = vmatpush1.bf16.msra.mxu0 0
        %936 = vmatprep.subr.bf16.mxu0 0
        %937 = vmatpush1.bf16.msra.mxu0 0
        %938 = vmatprep.subr.bf16.mxu0 0
        %939 = vmatpush1.bf16.msra.mxu0 0
        %940 = vmatprep.subr.bf16.mxu0 0
        %941 = vmatpush1.bf16.msra.mxu0 0
        %942 = vmatprep.subr.bf16.mxu0 0
        %943 = vmatpush1.bf16.msra.mxu0 0
        %944 = vmatprep.subr.bf16.mxu0 0
        %945 = vmatpush1.bf16.msra.mxu0 0
        %946 = vmatprep.subr.bf16.mxu0 0
        %947 = vmatpush1.bf16.msra.mxu0 %v932
        %948 = vmatprep.subr.bf16.mxu0 0
        %949 = vmatpush1.bf16.msra.mxu0 %v869
        %950 = vmatprep.subr.bf16.mxu0 0
        %951 = vmatpush2.bf16.msra.mxu0 0
        %952 = vmatprep.subr.bf16.mxu0 0
        %953 = vmatpush2.bf16.msra.mxu0 0
        %954 = vmatprep.subr.bf16.mxu0 0
        %955 = vmatpush2.bf16.msra.mxu0 0
        %956 = vmatprep.subr.bf16.mxu0 0
        %957 = vmatpush2.bf16.msra.mxu0 0
        %958 = vmatprep.subr.bf16.mxu0 0
        %959 = vmatpush2.bf16.msra.mxu0 0
        %960 = vmatprep.subr.bf16.mxu0 0
        %961 = vmatpush2.bf16.msra.mxu0 0
        %962 = vmatprep.subr.bf16.mxu0 0
        %963 = vmatpush2.bf16.msra.mxu0 0
        %964 = vmatprep.subr.bf16.mxu0 0
        %965 = vmatpush2.bf16.msra.mxu0 0
        %966 = vmatprep.mubr.bf16.mxu0 0
        %967 = vmatmul.mubr.bf16.gmra.mxu0 %v874
        %v968 = vpop.f32.mrf.mxu0
        %v969 = vadd.f32 %v616, %v968
        %v970 = vpop.f32.mrf.mxu0
        %v971 = vpop.f32.mrf.mxu0
        %v972 = vadd.f32 %v619, %v971
        %v973 = vpop.f32.mrf.mxu0
        %974 = vmatprep.mubr.bf16.mxu0 0
        %975 = vmatmul.mubr.bf16.gmra.mxu0 %v877
        %v976 = vpop.f32.mrf.mxu0
        %v977 = vadd.f32 %v624, %v976
        %v978 = vpop.f32.mrf.mxu0
        %v979 = vpop.f32.mrf.mxu0
        %v980 = vadd.f32 %v627, %v979
        %v981 = vpop.f32.mrf.mxu0
        %982 = vmatprep.mubr.bf16.mxu0 0
        %983 = vmatmul.mubr.bf16.gmra.mxu0 %v880
        %v984 = vpop.f32.mrf.mxu0
        %v985 = vadd.f32 %v632, %v984
        %v986 = vpop.f32.mrf.mxu0
        %v987 = vpop.f32.mrf.mxu0
        %v988 = vadd.f32 %v635, %v987
        %v989 = vpop.f32.mrf.mxu0
        %990 = vmatprep.mubr.bf16.mxu0 0
        %991 = vmatmul.mubr.bf16.gmra.mxu0 %v883
        %v992 = vpop.f32.mrf.mxu0
        %v993 = vadd.f32 %v640, %v992
        %v994 = vpop.f32.mrf.mxu0
        %v995 = vpop.f32.mrf.mxu0
        %v996 = vadd.f32 %v643, %v995
        %v997 = vpop.f32.mrf.mxu0
        %998 = vmatprep.mubr.bf16.mxu0 0
        %999 = vmatmul.mubr.bf16.gmra.mxu0 %v886
        %v1000 = vpop.f32.mrf.mxu0
        %v1001 = vadd.f32 %v648, %v1000
        %v1002 = vpop.f32.mrf.mxu0
        %v1003 = vpop.f32.mrf.mxu0
        %v1004 = vadd.f32 %v651, %v1003
        %v1005 = vpop.f32.mrf.mxu0
        %1006 = vmatprep.mubr.bf16.mxu0 0
        %1007 = vmatmul.mubr.bf16.gmra.mxu0 %v889
        %v1008 = vpop.f32.mrf.mxu0
        %v1009 = vadd.f32 %v656, %v1008
        %v1010 = vpop.f32.mrf.mxu0
        %v1011 = vpop.f32.mrf.mxu0
        %v1012 = vadd.f32 %v659, %v1011
        %v1013 = vpop.f32.mrf.mxu0
        %1014 = vmatprep.mubr.bf16.mxu0 0
        %1015 = vmatmul.mubr.bf16.gmra.mxu0 %v892
        %v1016 = vpop.f32.mrf.mxu0
        %v1017 = vadd.f32 %v664, %v1016
        %v1018 = vpop.f32.mrf.mxu0
        %v1019 = vpop.f32.mrf.mxu0
        %v1020 = vadd.f32 %v667, %v1019
        %v1021 = vpop.f32.mrf.mxu0
        %1022 = vmatprep.mubr.bf16.mxu0 0
        %1023 = vmatmul.mubr.bf16.gmra.mxu0 %v895
        %v1024 = vpop.f32.mrf.mxu0
        %v1025 = vadd.f32 %v672, %v1024
        %v1026 = vpop.f32.mrf.mxu0
        %v1027 = vpop.f32.mrf.mxu0
        %v1028 = vadd.f32 %v675, %v1027
        %v1029 = vpop.f32.mrf.mxu0
        %1030 = vmatprep.mubr.bf16.mxu0 0
        %1031 = vmatmul.mubr.bf16.gmra.mxu0 %v898
        %v1032 = vpop.f32.mrf.mxu0
        %v1033 = vadd.f32 %v680, %v1032
        %v1034 = vpop.f32.mrf.mxu0
        %v1035 = vpop.f32.mrf.mxu0
        %v1036 = vadd.f32 %v683, %v1035
        %v1037 = vpop.f32.mrf.mxu0
        %1038 = vmatprep.mubr.bf16.mxu0 0
        %1039 = vmatmul.mubr.bf16.gmra.mxu0 %v901
        %v1040 = vpop.f32.mrf.mxu0
        %v1041 = vadd.f32 %v688, %v1040
        %v1042 = vpop.f32.mrf.mxu0
        %v1043 = vpop.f32.mrf.mxu0
        %v1044 = vadd.f32 %v691, %v1043
        %v1045 = vpop.f32.mrf.mxu0
        %1046 = vmatprep.mubr.bf16.mxu0 0
        %1047 = vmatmul.mubr.bf16.gmra.mxu0 %v904
        %v1048 = vpop.f32.mrf.mxu0
        %v1049 = vadd.f32 %v696, %v1048
        %v1050 = vpop.f32.mrf.mxu0
        %v1051 = vpop.f32.mrf.mxu0
        %v1052 = vadd.f32 %v699, %v1051
        %v1053 = vpop.f32.mrf.mxu0
        %1054 = vmatprep.mubr.bf16.mxu0 0
        %1055 = vmatmul.mubr.bf16.gmra.mxu0 %v907
        %v1056 = vpop.f32.mrf.mxu0
        %v1057 = vadd.f32 %v704, %v1056
        %v1058 = vpop.f32.mrf.mxu0
        %v1059 = vpop.f32.mrf.mxu0
        %v1060 = vadd.f32 %v707, %v1059
        %v1061 = vpop.f32.mrf.mxu0
        %1062 = vmatprep.mubr.bf16.mxu0 0
        %1063 = vmatmul.mubr.bf16.gmra.mxu0 %v910
        %v1064 = vpop.f32.mrf.mxu0
        %v1065 = vadd.f32 %v712, %v1064
        %v1066 = vpop.f32.mrf.mxu0
        %v1067 = vpop.f32.mrf.mxu0
        %v1068 = vadd.f32 %v715, %v1067
        %v1069 = vpop.f32.mrf.mxu0
        %1070 = vmatprep.mubr.bf16.mxu0 0
        %1071 = vmatmul.mubr.bf16.gmra.mxu0 %v913
        %v1072 = vpop.f32.mrf.mxu0
        %v1073 = vadd.f32 %v720, %v1072
        %v1074 = vpop.f32.mrf.mxu0
        %v1075 = vpop.f32.mrf.mxu0
        %v1076 = vadd.f32 %v723, %v1075
        %v1077 = vpop.f32.mrf.mxu0
        %1078 = vmatprep.mubr.bf16.mxu0 0
        %1079 = vmatmul.mubr.bf16.gmra.mxu0 %v916
        %v1080 = vpop.f32.mrf.mxu0
        %v1081 = vadd.f32 %v728, %v1080
        %v1082 = vpop.f32.mrf.mxu0
        %v1083 = vpop.f32.mrf.mxu0
        %v1084 = vadd.f32 %v731, %v1083
        %v1085 = vpop.f32.mrf.mxu0
        %1086 = vmatprep.mubr.bf16.mxu0 0
        %1087 = vmatmul.mubr.bf16.gmra.mxu0 %v919
        %v1088 = vpop.f32.mrf.mxu0
        %v1089 = vadd.f32 %v736, %v1088
        %v1090 = vpop.f32.mrf.mxu0
        %v1091 = vpop.f32.mrf.mxu0
        %v1092 = vadd.f32 %v739, %v1091
        %v1093 = vpop.f32.mrf.mxu0
        %1094 = vmatprep.mubr.bf16.mxu0 0
        %1095 = vmatmul.mubr.bf16.gmra.mxu0 %v922
        %v1096 = vpop.f32.mrf.mxu0
        %v1097 = vadd.f32 %v744, %v1096
        %v1098 = vpop.f32.mrf.mxu0
        %v1099 = vpop.f32.mrf.mxu0
        %v1100 = vadd.f32 %v747, %v1099
        %v1101 = vpop.f32.mrf.mxu0
        %1102 = vmatprep.mubr.bf16.mxu0 0
        %1103 = vmatmul.mubr.bf16.gmra.mxu0 %v925
        %v1104 = vpop.f32.mrf.mxu0
        %v1105 = vadd.f32 %v752, %v1104
        %v1106 = vpop.f32.mrf.mxu0
        %v1107 = vpop.f32.mrf.mxu0
        %v1108 = vadd.f32 %v755, %v1107
        %v1109 = vpop.f32.mrf.mxu0
        %1110 = vmatprep.mubr.bf16.mxu0 0
        %1111 = vmatmul.mubr.bf16.gmra.mxu0 %v928
        %v1112 = vpop.f32.mrf.mxu0
        %v1113 = vadd.f32 %v760, %v1112
        %v1114 = vpop.f32.mrf.mxu0
        %v1115 = vpop.f32.mrf.mxu0
        %v1116 = vadd.f32 %v763, %v1115
        %v1117 = vpop.f32.mrf.mxu0
        %1118 = vdwg.mxu0
        %v1119 = vld [vmem:[%s4] sm:$0x1]
        %v1121 = vlaneseq
        %v1122 = vshrl.u32 %v1121, 7
        %v1123 = vsub.s32 0, %v1122
        %v1124 = vrot.slane %v1119, %v1123
        %v1126 = vadd.f32 %v969, %v1124
        %v1127 = vadd.f32 %v972, %v1124
        %v1128 = vadd.f32 %v977, %v1124
        %v1129 = vadd.f32 %v980, %v1124
        %v1130 = vadd.f32 %v985, %v1124
        %v1131 = vadd.f32 %v988, %v1124
        %v1132 = vadd.f32 %v993, %v1124
        %v1133 = vadd.f32 %v996, %v1124
        %v1134 = vadd.f32 %v1001, %v1124
        %v1135 = vadd.f32 %v1004, %v1124
        %v1136 = vadd.f32 %v1009, %v1124
        %v1137 = vadd.f32 %v1012, %v1124
        %v1138 = vadd.f32 %v1017, %v1124
        %v1139 = vadd.f32 %v1020, %v1124
        %v1140 = vadd.f32 %v1025, %v1124
        %v1141 = vadd.f32 %v1028, %v1124
        %v1142 = vadd.f32 %v1033, %v1124
        %v1143 = vadd.f32 %v1036, %v1124
        %v1144 = vadd.f32 %v1041, %v1124
        %v1145 = vadd.f32 %v1044, %v1124
        %v1146 = vadd.f32 %v1049, %v1124
        %v1147 = vadd.f32 %v1052, %v1124
        %v1148 = vadd.f32 %v1057, %v1124
        %v1149 = vadd.f32 %v1060, %v1124
        %v1150 = vadd.f32 %v1065, %v1124
        %v1151 = vadd.f32 %v1068, %v1124
        %v1152 = vadd.f32 %v1073, %v1124
        %v1153 = vadd.f32 %v1076, %v1124
        %v1154 = vadd.f32 %v1081, %v1124
        %v1155 = vadd.f32 %v1084, %v1124
        %v1156 = vadd.f32 %v1089, %v1124
        %v1157 = vadd.f32 %v1092, %v1124
        %v1158 = vadd.f32 %v1097, %v1124
        %v1159 = vadd.f32 %v1100, %v1124
        %v1160 = vadd.f32 %v1105, %v1124
        %v1161 = vadd.f32 %v1108, %v1124
        %v1162 = vadd.f32 %v1113, %v1124
        %v1163 = vadd.f32 %v1116, %v1124
        %v1164 = vmax.f32 %v1126, 0.0
        %v1165 = vmax.f32 %v1127, 0.0
        %v1166 = vmax.f32 %v1128, 0.0
        %v1167 = vmax.f32 %v1129, 0.0
        %v1168 = vmax.f32 %v1130, 0.0
        %v1169 = vmax.f32 %v1131, 0.0
        %v1170 = vmax.f32 %v1132, 0.0
        %v1171 = vmax.f32 %v1133, 0.0
        %v1172 = vmax.f32 %v1134, 0.0
        %v1173 = vmax.f32 %v1135, 0.0
        %v1174 = vmax.f32 %v1136, 0.0
        %v1175 = vmax.f32 %v1137, 0.0
        %v1176 = vmax.f32 %v1138, 0.0
        %v1177 = vmax.f32 %v1139, 0.0
        %v1178 = vmax.f32 %v1140, 0.0
        %v1179 = vmax.f32 %v1141, 0.0
        %v1180 = vmax.f32 %v1142, 0.0
        %v1181 = vmax.f32 %v1143, 0.0
        %v1182 = vmax.f32 %v1144, 0.0
        %v1183 = vmax.f32 %v1145, 0.0
        %v1184 = vmax.f32 %v1146, 0.0
        %v1185 = vmax.f32 %v1147, 0.0
        %v1186 = vmax.f32 %v1148, 0.0
        %v1187 = vmax.f32 %v1149, 0.0
        %v1188 = vmax.f32 %v1150, 0.0
        %v1189 = vmax.f32 %v1151, 0.0
        %v1190 = vmax.f32 %v1152, 0.0
        %v1191 = vmax.f32 %v1153, 0.0
        %v1192 = vmax.f32 %v1154, 0.0
        %v1193 = vmax.f32 %v1155, 0.0
        %v1194 = vmax.f32 %v1156, 0.0
        %v1195 = vmax.f32 %v1157, 0.0
        %v1196 = vmax.f32 %v1158, 0.0
        %v1197 = vmax.f32 %v1159, 0.0
        %v1198 = vmax.f32 %v1160, 0.0
        %v1199 = vmax.f32 %v1161, 0.0
        %v1200 = vmax.f32 %v1162, 0.0
        %v1201 = vmax.f32 %v1163, 0.0
        %v1202 = vpack.c.bf16 %v1165, %v1164
        %v1203 = vpack.c.bf16 %v1167, %v1166
        %v1204 = vpack.c.bf16 %v1169, %v1168
        %v1205 = vpack.c.bf16 %v1171, %v1170
        %v1206 = vpack.c.bf16 %v1173, %v1172
        %v1207 = vpack.c.bf16 %v1175, %v1174
        %v1208 = vpack.c.bf16 %v1177, %v1176
        %v1209 = vpack.c.bf16 %v1179, %v1178
        %v1210 = vpack.c.bf16 %v1181, %v1180
        %v1211 = vpack.c.bf16 %v1183, %v1182
        %v1212 = vpack.c.bf16 %v1185, %v1184
        %v1213 = vpack.c.bf16 %v1187, %v1186
        %v1214 = vpack.c.bf16 %v1189, %v1188
        %v1215 = vpack.c.bf16 %v1191, %v1190
        %v1216 = vpack.c.bf16 %v1193, %v1192
        %v1217 = vpack.c.bf16 %v1195, %v1194
        %v1218 = vpack.c.bf16 %v1197, %v1196
        %v1219 = vpack.c.bf16 %v1199, %v1198
        %v1220 = vpack.c.bf16 %v1201, %v1200
        %v1221 = vld [vmem:[%s5] sm:$0xf]
        %v1222 = vld [vmem:[%s5 + $0x4] sm:$0xf]
        %v1223 = vld [vmem:[%s5 + $0x8] sm:$0xf]
        %v1224 = vld [vmem:[%s5 + $0xc] sm:$0xf]
        %v1225 = vld [vmem:[%s5 + $0x10] sm:$0xf]
        %v1226 = vld [vmem:[%s5 + $0x14] sm:$0xf]
        %v1227 = vld [vmem:[%s5 + $0x18] sm:$0xf]
        %v1228 = vld [vmem:[%s5 + $0x1c] sm:$0xf]
        %v1229 = vld [vmem:[%s5 + $0x20] sm:$0xf]
        %v1230 = vld [vmem:[%s5 + $0x24] sm:$0xf]
        %v1231 = vld [vmem:[%s5 + $0x28] sm:$0xf]
        %v1232 = vld [vmem:[%s5 + $0x2c] sm:$0xf]
        %v1233 = vld [vmem:[%s5 + $0x30] sm:$0xf]
        %v1234 = vld [vmem:[%s5 + $0x34] sm:$0xf]
        %v1235 = vld [vmem:[%s5 + $0x38] sm:$0xf]
        %v1236 = vld [vmem:[%s5 + $0x3c] sm:$0xf]
        %v1237 = vld [vmem:[%s6] sm:$0x1]
        %v1239 = vlaneseq
        %v1240 = vshrl.u32 %v1239, 7
        %v1241 = vsub.s32 0, %v1240
        %v1242 = vrot.slane %v1237, %v1241
        %v1260 = vunpack.c.l.b16 %v1221
        %v1261 = vunpack.c.l.b16 %v1222
        %v1262 = vunpack.c.l.b16 %v1223
        %v1263 = vunpack.c.l.b16 %v1224
        %v1264 = vunpack.c.l.b16 %v1225
        %v1265 = vunpack.c.l.b16 %v1226
        %v1266 = vunpack.c.l.b16 %v1227
        %v1267 = vunpack.c.l.b16 %v1228
        %v1268 = vunpack.c.l.b16 %v1229
        %v1269 = vunpack.c.l.b16 %v1230
        %v1270 = vunpack.c.l.b16 %v1231
        %v1271 = vunpack.c.l.b16 %v1232
        %v1272 = vunpack.c.l.b16 %v1233
        %v1273 = vunpack.c.l.b16 %v1234
        %v1274 = vunpack.c.l.b16 %v1235
        %v1275 = vunpack.c.l.b16 %v1236
        %v1276 = vpack.c.b16 %v1261, %v1260
        %v1277 = vpack.c.b16 %v1263, %v1262
        %v1278 = vpack.c.b16 %v1265, %v1264
        %v1279 = vpack.c.b16 %v1267, %v1266
        %v1280 = vpack.c.b16 %v1269, %v1268
        %v1281 = vpack.c.b16 %v1271, %v1270
        %v1282 = vpack.c.b16 %v1273, %v1272
        %v1283 = vpack.c.b16 %v1275, %v1274
        %1292 = vmatprep.subr.bf16.mxu0 0
        %1293 = vmatpush1.bf16.msra.mxu0 %v1283
        %1294 = vmatprep.subr.bf16.mxu0 0
        %1295 = vmatpush1.bf16.msra.mxu0 %v1282
        %1296 = vmatprep.subr.bf16.mxu0 0
        %1297 = vmatpush1.bf16.msra.mxu0 %v1281
        %1298 = vmatprep.subr.bf16.mxu0 0
        %1299 = vmatpush1.bf16.msra.mxu0 %v1280
        %1300 = vmatprep.subr.bf16.mxu0 0
        %1301 = vmatpush1.bf16.msra.mxu0 %v1279
        %1302 = vmatprep.subr.bf16.mxu0 0
        %1303 = vmatpush1.bf16.msra.mxu0 %v1278
        %1304 = vmatprep.subr.bf16.mxu0 0
        %1305 = vmatpush1.bf16.msra.mxu0 %v1277
        %1306 = vmatprep.subr.bf16.mxu0 0
        %1307 = vmatpush1.bf16.msra.mxu0 %v1276
        %1308 = vmatprep.subr.bf16.mxu0 0
        %1309 = vmatpush2.bf16.msra.mxu0 0
        %1310 = vmatprep.subr.bf16.mxu0 0
        %1311 = vmatpush2.bf16.msra.mxu0 0
        %1312 = vmatprep.subr.bf16.mxu0 0
        %1313 = vmatpush2.bf16.msra.mxu0 0
        %1314 = vmatprep.subr.bf16.mxu0 0
        %1315 = vmatpush2.bf16.msra.mxu0 0
        %1316 = vmatprep.subr.bf16.mxu0 0
        %1317 = vmatpush2.bf16.msra.mxu0 0
        %1318 = vmatprep.subr.bf16.mxu0 0
        %1319 = vmatpush2.bf16.msra.mxu0 0
        %1320 = vmatprep.subr.bf16.mxu0 0
        %1321 = vmatpush2.bf16.msra.mxu0 0
        %1322 = vmatprep.subr.bf16.mxu0 0
        %1323 = vmatpush2.bf16.msra.mxu0 0
        %1324 = vmatprep.mubr.bf16.mxu0 0
        %1325 = vmatmul.mubr.bf16.gmra.mxu0 %v1202
        %v1326 = vpop.f32.mrf.mxu0
        %v1327 = vadd.f32 %v1242, %v1326
        %v1328 = vpop.f32.mrf.mxu0
        %v1329 = vpop.f32.mrf.mxu0
        %v1330 = vadd.f32 %v1242, %v1329
        %v1331 = vpop.f32.mrf.mxu0
        %1332 = vmatprep.mubr.bf16.mxu0 0
        %1333 = vmatmul.mubr.bf16.gmra.mxu0 %v1203
        %v1334 = vpop.f32.mrf.mxu0
        %v1335 = vadd.f32 %v1242, %v1334
        %v1336 = vpop.f32.mrf.mxu0
        %v1337 = vpop.f32.mrf.mxu0
        %v1338 = vadd.f32 %v1242, %v1337
        %v1339 = vpop.f32.mrf.mxu0
        %1340 = vmatprep.mubr.bf16.mxu0 0
        %1341 = vmatmul.mubr.bf16.gmra.mxu0 %v1204
        %v1342 = vpop.f32.mrf.mxu0
        %v1343 = vadd.f32 %v1242, %v1342
        %v1344 = vpop.f32.mrf.mxu0
        %v1345 = vpop.f32.mrf.mxu0
        %v1346 = vadd.f32 %v1242, %v1345
        %v1347 = vpop.f32.mrf.mxu0
        %1348 = vmatprep.mubr.bf16.mxu0 0
        %1349 = vmatmul.mubr.bf16.gmra.mxu0 %v1205
        %v1350 = vpop.f32.mrf.mxu0
        %v1351 = vadd.f32 %v1242, %v1350
        %v1352 = vpop.f32.mrf.mxu0
        %v1353 = vpop.f32.mrf.mxu0
        %v1354 = vadd.f32 %v1242, %v1353
        %v1355 = vpop.f32.mrf.mxu0
        %1356 = vmatprep.mubr.bf16.mxu0 0
        %1357 = vmatmul.mubr.bf16.gmra.mxu0 %v1206
        %v1358 = vpop.f32.mrf.mxu0
        %v1359 = vadd.f32 %v1242, %v1358
        %v1360 = vpop.f32.mrf.mxu0
        %v1361 = vpop.f32.mrf.mxu0
        %v1362 = vadd.f32 %v1242, %v1361
        %v1363 = vpop.f32.mrf.mxu0
        %1364 = vmatprep.mubr.bf16.mxu0 0
        %1365 = vmatmul.mubr.bf16.gmra.mxu0 %v1207
        %v1366 = vpop.f32.mrf.mxu0
        %v1367 = vadd.f32 %v1242, %v1366
        %v1368 = vpop.f32.mrf.mxu0
        %v1369 = vpop.f32.mrf.mxu0
        %v1370 = vadd.f32 %v1242, %v1369
        %v1371 = vpop.f32.mrf.mxu0
        %1372 = vmatprep.mubr.bf16.mxu0 0
        %1373 = vmatmul.mubr.bf16.gmra.mxu0 %v1208
        %v1374 = vpop.f32.mrf.mxu0
        %v1375 = vadd.f32 %v1242, %v1374
        %v1376 = vpop.f32.mrf.mxu0
        %v1377 = vpop.f32.mrf.mxu0
        %v1378 = vadd.f32 %v1242, %v1377
        %v1379 = vpop.f32.mrf.mxu0
        %1380 = vmatprep.mubr.bf16.mxu0 0
        %1381 = vmatmul.mubr.bf16.gmra.mxu0 %v1209
        %v1382 = vpop.f32.mrf.mxu0
        %v1383 = vadd.f32 %v1242, %v1382
        %v1384 = vpop.f32.mrf.mxu0
        %v1385 = vpop.f32.mrf.mxu0
        %v1386 = vadd.f32 %v1242, %v1385
        %v1387 = vpop.f32.mrf.mxu0
        %1388 = vmatprep.mubr.bf16.mxu0 0
        %1389 = vmatmul.mubr.bf16.gmra.mxu0 %v1210
        %v1390 = vpop.f32.mrf.mxu0
        %v1391 = vadd.f32 %v1242, %v1390
        %v1392 = vpop.f32.mrf.mxu0
        %v1393 = vpop.f32.mrf.mxu0
        %v1394 = vadd.f32 %v1242, %v1393
        %v1395 = vpop.f32.mrf.mxu0
        %1396 = vmatprep.mubr.bf16.mxu0 0
        %1397 = vmatmul.mubr.bf16.gmra.mxu0 %v1211
        %v1398 = vpop.f32.mrf.mxu0
        %v1399 = vadd.f32 %v1242, %v1398
        %v1400 = vpop.f32.mrf.mxu0
        %v1401 = vpop.f32.mrf.mxu0
        %v1402 = vadd.f32 %v1242, %v1401
        %v1403 = vpop.f32.mrf.mxu0
        %1404 = vmatprep.mubr.bf16.mxu0 0
        %1405 = vmatmul.mubr.bf16.gmra.mxu0 %v1212
        %v1406 = vpop.f32.mrf.mxu0
        %v1407 = vadd.f32 %v1242, %v1406
        %v1408 = vpop.f32.mrf.mxu0
        %v1409 = vpop.f32.mrf.mxu0
        %v1410 = vadd.f32 %v1242, %v1409
        %v1411 = vpop.f32.mrf.mxu0
        %1412 = vmatprep.mubr.bf16.mxu0 0
        %1413 = vmatmul.mubr.bf16.gmra.mxu0 %v1213
        %v1414 = vpop.f32.mrf.mxu0
        %v1415 = vadd.f32 %v1242, %v1414
        %v1416 = vpop.f32.mrf.mxu0
        %v1417 = vpop.f32.mrf.mxu0
        %v1418 = vadd.f32 %v1242, %v1417
        %v1419 = vpop.f32.mrf.mxu0
        %1420 = vmatprep.mubr.bf16.mxu0 0
        %1421 = vmatmul.mubr.bf16.gmra.mxu0 %v1214
        %v1422 = vpop.f32.mrf.mxu0
        %v1423 = vadd.f32 %v1242, %v1422
        %v1424 = vpop.f32.mrf.mxu0
        %v1425 = vpop.f32.mrf.mxu0
        %v1426 = vadd.f32 %v1242, %v1425
        %v1427 = vpop.f32.mrf.mxu0
        %1428 = vmatprep.mubr.bf16.mxu0 0
        %1429 = vmatmul.mubr.bf16.gmra.mxu0 %v1215
        %v1430 = vpop.f32.mrf.mxu0
        %v1431 = vadd.f32 %v1242, %v1430
        %v1432 = vpop.f32.mrf.mxu0
        %v1433 = vpop.f32.mrf.mxu0
        %v1434 = vadd.f32 %v1242, %v1433
        %v1435 = vpop.f32.mrf.mxu0
        %1436 = vmatprep.mubr.bf16.mxu0 0
        %1437 = vmatmul.mubr.bf16.gmra.mxu0 %v1216
        %v1438 = vpop.f32.mrf.mxu0
        %v1439 = vadd.f32 %v1242, %v1438
        %v1440 = vpop.f32.mrf.mxu0
        %v1441 = vpop.f32.mrf.mxu0
        %v1442 = vadd.f32 %v1242, %v1441
        %v1443 = vpop.f32.mrf.mxu0
        %1444 = vmatprep.mubr.bf16.mxu0 0
        %1445 = vmatmul.mubr.bf16.gmra.mxu0 %v1217
        %v1446 = vpop.f32.mrf.mxu0
        %v1447 = vadd.f32 %v1242, %v1446
        %v1448 = vpop.f32.mrf.mxu0
        %v1449 = vpop.f32.mrf.mxu0
        %v1450 = vadd.f32 %v1242, %v1449
        %v1451 = vpop.f32.mrf.mxu0
        %1452 = vmatprep.mubr.bf16.mxu0 0
        %1453 = vmatmul.mubr.bf16.gmra.mxu0 %v1218
        %v1454 = vpop.f32.mrf.mxu0
        %v1455 = vadd.f32 %v1242, %v1454
        %v1456 = vpop.f32.mrf.mxu0
        %v1457 = vpop.f32.mrf.mxu0
        %v1458 = vadd.f32 %v1242, %v1457
        %v1459 = vpop.f32.mrf.mxu0
        %1460 = vmatprep.mubr.bf16.mxu0 0
        %1461 = vmatmul.mubr.bf16.gmra.mxu0 %v1219
        %v1462 = vpop.f32.mrf.mxu0
        %v1463 = vadd.f32 %v1242, %v1462
        %v1464 = vpop.f32.mrf.mxu0
        %v1465 = vpop.f32.mrf.mxu0
        %v1466 = vadd.f32 %v1242, %v1465
        %v1467 = vpop.f32.mrf.mxu0
        %1468 = vmatprep.mubr.bf16.mxu0 0
        %1469 = vmatmul.mubr.bf16.gmra.mxu0 %v1220
        %v1470 = vpop.f32.mrf.mxu0
        %v1471 = vadd.f32 %v1242, %v1470
        %v1472 = vpop.f32.mrf.mxu0
        %v1473 = vpop.f32.mrf.mxu0
        %v1474 = vadd.f32 %v1242, %v1473
        %v1475 = vpop.f32.mrf.mxu0
        %1476 = vdwg.mxu0
        %vm1477 = vcmask 130048
        %1478 = vst.msk [vmem:[%s308] sm:$0xff] %vm1477, %v1327
        %1479 = vst.msk [vmem:[%s308 + $0x8] sm:$0xff] %vm1477, %v1330
        %1480 = vst.msk [vmem:[%s308 + $0x10] sm:$0xff] %vm1477, %v1335
        %1481 = vst.msk [vmem:[%s308 + $0x18] sm:$0xff] %vm1477, %v1338
        %1482 = vst.msk [vmem:[%s308 + $0x20] sm:$0xff] %vm1477, %v1343
        %1483 = vst.msk [vmem:[%s308 + $0x28] sm:$0xff] %vm1477, %v1346
        %1484 = vst.msk [vmem:[%s308 + $0x30] sm:$0xff] %vm1477, %v1351
        %1485 = vst.msk [vmem:[%s308 + $0x38] sm:$0xff] %vm1477, %v1354
        %1486 = vst.msk [vmem:[%s308 + $0x40] sm:$0xff] %vm1477, %v1359
        %1487 = vst.msk [vmem:[%s308 + $0x48] sm:$0xff] %vm1477, %v1362
        %1488 = vst.msk [vmem:[%s308 + $0x50] sm:$0xff] %vm1477, %v1367
        %1489 = vst.msk [vmem:[%s308 + $0x58] sm:$0xff] %vm1477, %v1370
        %1490 = vst.msk [vmem:[%s308 + $0x60] sm:$0xff] %vm1477, %v1375
        %1491 = vst.msk [vmem:[%s308 + $0x68] sm:$0xff] %vm1477, %v1378
        %1492 = vst.msk [vmem:[%s308 + $0x70] sm:$0xff] %vm1477, %v1383
        %1493 = vst.msk [vmem:[%s308 + $0x78] sm:$0xff] %vm1477, %v1386
        %1494 = vst.msk [vmem:[%s308 + $0x80] sm:$0xff] %vm1477, %v1391
        %1495 = vst.msk [vmem:[%s308 + $0x88] sm:$0xff] %vm1477, %v1394
        %1496 = vst.msk [vmem:[%s308 + $0x90] sm:$0xff] %vm1477, %v1399
        %1497 = vst.msk [vmem:[%s308 + $0x98] sm:$0xff] %vm1477, %v1402
        %1498 = vst.msk [vmem:[%s308 + $0xa0] sm:$0xff] %vm1477, %v1407
        %1499 = vst.msk [vmem:[%s308 + $0xa8] sm:$0xff] %vm1477, %v1410
        %1500 = vst.msk [vmem:[%s308 + $0xb0] sm:$0xff] %vm1477, %v1415
        %1501 = vst.msk [vmem:[%s308 + $0xb8] sm:$0xff] %vm1477, %v1418
        %1502 = vst.msk [vmem:[%s308 + $0xc0] sm:$0xff] %vm1477, %v1423
        %1503 = vst.msk [vmem:[%s308 + $0xc8] sm:$0xff] %vm1477, %v1426
        %1504 = vst.msk [vmem:[%s308 + $0xd0] sm:$0xff] %vm1477, %v1431
        %1505 = vst.msk [vmem:[%s308 + $0xd8] sm:$0xff] %vm1477, %v1434
        %1506 = vst.msk [vmem:[%s308 + $0xe0] sm:$0xff] %vm1477, %v1439
        %1507 = vst.msk [vmem:[%s308 + $0xe8] sm:$0xff] %vm1477, %v1442
        %1508 = vst.msk [vmem:[%s308 + $0xf0] sm:$0xff] %vm1477, %v1447
        %1509 = vst.msk [vmem:[%s308 + $0xf8] sm:$0xff] %vm1477, %v1450
        %1510 = vst.msk [vmem:[%s308 + $0x100] sm:$0xff] %vm1477, %v1455
        %1511 = vst.msk [vmem:[%s308 + $0x108] sm:$0xff] %vm1477, %v1458
        %1512 = vst.msk [vmem:[%s308 + $0x110] sm:$0xff] %vm1477, %v1463
        %1513 = vst.msk [vmem:[%s308 + $0x118] sm:$0xff] %vm1477, %v1466
        %1514 = vst.msk [vmem:[%s308 + $0x120] sm:$0xff] %vm1477, %v1471
        %1515 = vst.msk [vmem:[%s308 + $0x128] sm:$0xff] %vm1477, %v1474
        %s1516 = sand.u32 %s183, 1
        %s1517 = sand.u32 %s183, 1
        %s1518 = smul.addr %s1517, 304
        %s1519 = scalar_lea.vmem [#allocation2], %s1518
        // Predicated region
        $region49: #{flowgnn_conv_block.2} parent=47 // pred_check
          %p1520 = pneg %p193
        $region50: #{flowgnn_conv_block.2} parent=47 // pred_check_branch
          %1522 = sbr.rel (%p1520) target = $region52
        $region51: #{flowgnn_conv_block.2} parent=47 // pred_region
          %s1523 = smul.u32 38, %s18
          %s1524 = ssub.s32 75, %s1523
          %p1525 = scmp.lt.s32.totalorder %s1524, 38
          %s1526 = scalar_select %p1525, %s1524, 38
          %s1527 = smul.u32 128, %s1526
          %p1528 = scmp.ne.s32.totalorder 0, %s1527
          %s1529 = smul.addr %s1523, 8
          %s1530 = scalar_lea.vmem %s7, %s1529
          // Predicated region
          $region53: #{flowgnn_conv_block.2} parent=51 // pred_check
            %p1531 = pneg %p1528
          $region54: #{flowgnn_conv_block.2} parent=51 // pred_check_branch
            %1533 = sbr.rel (%p1531) target = $region56
          $region55: #{flowgnn_conv_block.2} parent=51 // pred_region
            // Predicated region
            $region57: #{flowgnn_conv_block.2} parent=55 // pred_check
              _
            $region58: #{flowgnn_conv_block.2} parent=55 // pred_check_branch
              %1535 = sbr.rel (0) target = $region60
            $region59: #{flowgnn_conv_block.2} parent=55 // pred_region
              // Predicated region
              $region79: #{flowgnn_conv_block.2} parent=59 // pred_check
                _
              $region80: #{flowgnn_conv_block.2} parent=59 // pred_check_branch
                %1660 = sbr.rel (0) target = $region82
              $region81: #{flowgnn_conv_block.2} parent=59 // pred_region
                %s1661 = sdiv.u32.pop %s1526, 38
                %s1662 = srem.u32.pop %s1526, 38
                // While loop
                $region83: #{flowgnn_conv_block.2} parent=81 // loop_pre_header
                  _
                $region84: #{flowgnn_conv_block.2} parent=81 // loop_header
                  %s1664 = sphi 0, %s1666
                  %p1665 = scmp.ge.s32.totalorder %s1664, %s1661
                  %s1669 = sphi 0, %s1750
                  %s1670 = sphi %s1519, %s1753
                  %s1671 = sphi %s1530, %s1754
                $region85: #{flowgnn_conv_block.2} parent=81 // loop_header_branch
                  %1668 = sbr.rel (%p1665) target = $region89
                $region86: #{flowgnn_conv_block.2} parent=81 // loop_body
                  %v1672 = vld [vmem:[%s1670] sm:$0xff]
                  %1673 = vst [vmem:[%s1671] sm:$0xff] %v1672
                  %v1674 = vld [vmem:[%s1670 + $0x8] sm:$0xff]
                  %1675 = vst [vmem:[%s1671 + $0x8] sm:$0xff] %v1674
                  %v1676 = vld [vmem:[%s1670 + $0x10] sm:$0xff]
                  %1677 = vst [vmem:[%s1671 + $0x10] sm:$0xff] %v1676
                  %v1678 = vld [vmem:[%s1670 + $0x18] sm:$0xff]
                  %1679 = vst [vmem:[%s1671 + $0x18] sm:$0xff] %v1678
                  %v1680 = vld [vmem:[%s1670 + $0x20] sm:$0xff]
                  %1681 = vst [vmem:[%s1671 + $0x20] sm:$0xff] %v1680
                  %v1682 = vld [vmem:[%s1670 + $0x28] sm:$0xff]
                  %1683 = vst [vmem:[%s1671 + $0x28] sm:$0xff] %v1682
                  %v1684 = vld [vmem:[%s1670 + $0x30] sm:$0xff]
                  %1685 = vst [vmem:[%s1671 + $0x30] sm:$0xff] %v1684
                  %v1686 = vld [vmem:[%s1670 + $0x38] sm:$0xff]
                  %1687 = vst [vmem:[%s1671 + $0x38] sm:$0xff] %v1686
                  %v1688 = vld [vmem:[%s1670 + $0x40] sm:$0xff]
                  %1689 = vst [vmem:[%s1671 + $0x40] sm:$0xff] %v1688
                  %v1690 = vld [vmem:[%s1670 + $0x48] sm:$0xff]
                  %1691 = vst [vmem:[%s1671 + $0x48] sm:$0xff] %v1690
                  %v1692 = vld [vmem:[%s1670 + $0x50] sm:$0xff]
                  %1693 = vst [vmem:[%s1671 + $0x50] sm:$0xff] %v1692
                  %v1694 = vld [vmem:[%s1670 + $0x58] sm:$0xff]
                  %1695 = vst [vmem:[%s1671 + $0x58] sm:$0xff] %v1694
                  %v1696 = vld [vmem:[%s1670 + $0x60] sm:$0xff]
                  %1697 = vst [vmem:[%s1671 + $0x60] sm:$0xff] %v1696
                  %v1698 = vld [vmem:[%s1670 + $0x68] sm:$0xff]
                  %1699 = vst [vmem:[%s1671 + $0x68] sm:$0xff] %v1698
                  %v1700 = vld [vmem:[%s1670 + $0x70] sm:$0xff]
                  %1701 = vst [vmem:[%s1671 + $0x70] sm:$0xff] %v1700
                  %v1702 = vld [vmem:[%s1670 + $0x78] sm:$0xff]
                  %1703 = vst [vmem:[%s1671 + $0x78] sm:$0xff] %v1702
                  %v1704 = vld [vmem:[%s1670 + $0x80] sm:$0xff]
                  %1705 = vst [vmem:[%s1671 + $0x80] sm:$0xff] %v1704
                  %v1706 = vld [vmem:[%s1670 + $0x88] sm:$0xff]
                  %1707 = vst [vmem:[%s1671 + $0x88] sm:$0xff] %v1706
                  %v1708 = vld [vmem:[%s1670 + $0x90] sm:$0xff]
                  %1709 = vst [vmem:[%s1671 + $0x90] sm:$0xff] %v1708
                  %v1710 = vld [vmem:[%s1670 + $0x98] sm:$0xff]
                  %1711 = vst [vmem:[%s1671 + $0x98] sm:$0xff] %v1710
                  %v1712 = vld [vmem:[%s1670 + $0xa0] sm:$0xff]
                  %1713 = vst [vmem:[%s1671 + $0xa0] sm:$0xff] %v1712
                  %v1714 = vld [vmem:[%s1670 + $0xa8] sm:$0xff]
                  %1715 = vst [vmem:[%s1671 + $0xa8] sm:$0xff] %v1714
                  %v1716 = vld [vmem:[%s1670 + $0xb0] sm:$0xff]
                  %1717 = vst [vmem:[%s1671 + $0xb0] sm:$0xff] %v1716
                  %v1718 = vld [vmem:[%s1670 + $0xb8] sm:$0xff]
                  %1719 = vst [vmem:[%s1671 + $0xb8] sm:$0xff] %v1718
                  %v1720 = vld [vmem:[%s1670 + $0xc0] sm:$0xff]
                  %1721 = vst [vmem:[%s1671 + $0xc0] sm:$0xff] %v1720
                  %v1722 = vld [vmem:[%s1670 + $0xc8] sm:$0xff]
                  %1723 = vst [vmem:[%s1671 + $0xc8] sm:$0xff] %v1722
                  %v1724 = vld [vmem:[%s1670 + $0xd0] sm:$0xff]
                  %1725 = vst [vmem:[%s1671 + $0xd0] sm:$0xff] %v1724
                  %v1726 = vld [vmem:[%s1670 + $0xd8] sm:$0xff]
                  %1727 = vst [vmem:[%s1671 + $0xd8] sm:$0xff] %v1726
                  %v1728 = vld [vmem:[%s1670 + $0xe0] sm:$0xff]
                  %1729 = vst [vmem:[%s1671 + $0xe0] sm:$0xff] %v1728
                  %v1730 = vld [vmem:[%s1670 + $0xe8] sm:$0xff]
                  %1731 = vst [vmem:[%s1671 + $0xe8] sm:$0xff] %v1730
                  %v1732 = vld [vmem:[%s1670 + $0xf0] sm:$0xff]
                  %1733 = vst [vmem:[%s1671 + $0xf0] sm:$0xff] %v1732
                  %v1734 = vld [vmem:[%s1670 + $0xf8] sm:$0xff]
                  %1735 = vst [vmem:[%s1671 + $0xf8] sm:$0xff] %v1734
                  %v1736 = vld [vmem:[%s1670 + $0x100] sm:$0xff]
                  %1737 = vst [vmem:[%s1671 + $0x100] sm:$0xff] %v1736
                  %v1738 = vld [vmem:[%s1670 + $0x108] sm:$0xff]
                  %1739 = vst [vmem:[%s1671 + $0x108] sm:$0xff] %v1738
                  %v1740 = vld [vmem:[%s1670 + $0x110] sm:$0xff]
                  %1741 = vst [vmem:[%s1671 + $0x110] sm:$0xff] %v1740
                  %v1742 = vld [vmem:[%s1670 + $0x118] sm:$0xff]
                  %1743 = vst [vmem:[%s1671 + $0x118] sm:$0xff] %v1742
                  %v1744 = vld [vmem:[%s1670 + $0x120] sm:$0xff]
                  %1745 = vst [vmem:[%s1671 + $0x120] sm:$0xff] %v1744
                  %v1746 = vld [vmem:[%s1670 + $0x128] sm:$0xff]
                  %1747 = vst [vmem:[%s1671 + $0x128] sm:$0xff] %v1746
                  %s1748 = sadd.s32 1, %s1669
                  %p1749 = scmp.ge.s32.totalorder %s1748, %s1661
                  %s1750 = scalar_select %p1749, 0, %s1748
                  %s1751 = smul.u32 %s1750, 304
                  %s1752 = smul.u32 %s1750, 304
                  %s1753 = scalar_lea.vmem %s1519, %s1751 [#allocation2]
                  %s1754 = scalar_lea.vmem %s1530, %s1752
                $region87: #{flowgnn_conv_block.2} parent=81 // loop_footer
                  %s1666 = sadd.s32 %s1664, 1
                $region88: #{flowgnn_conv_block.2} parent=81 // loop_footer_branch
                  %1663 = sbr.rel target = $region84
                $region89: #{flowgnn_conv_block.2} parent=81 // loop_exit
                  _
                %s1755 = sdiv.u32.pop %s1526, 38
                %s1756 = srem.u32.pop %s1526, 38
                %s1757 = smul.u32 %s1755, 38
                %s1758 = smul.u32 8, %s1757
                %s1759 = scalar_lea.vmem %s1519, %s1758 [#allocation2]
                %s1760 = smul.u32 8, %s1757
                %s1761 = scalar_lea.vmem %s1530, %s1760
                // While loop
                $region90: #{flowgnn_conv_block.2} parent=81 // loop_pre_header
                  _
                $region91: #{flowgnn_conv_block.2} parent=81 // loop_header
                  %s1763 = sphi 0, %s1765
                  %p1764 = scmp.ge.s32.totalorder %s1763, %s1756
                  %s1768 = sphi 0, %s1775
                  %s1769 = sphi %s1759, %s1778
                  %s1770 = sphi %s1761, %s1779
                $region92: #{flowgnn_conv_block.2} parent=81 // loop_header_branch
                  %1767 = sbr.rel (%p1764) target = $region96
                $region93: #{flowgnn_conv_block.2} parent=81 // loop_body
                  %v1771 = vld [vmem:[%s1769] sm:$0xff]
                  %1772 = vst [vmem:[%s1770] sm:$0xff] %v1771
                  %s1773 = sadd.s32 1, %s1768
                  %p1774 = scmp.ge.s32.totalorder %s1773, %s1756
                  %s1775 = scalar_select %p1774, 0, %s1773
                  %s1776 = smul.u32 %s1775, 8
                  %s1777 = smul.u32 %s1775, 8
                  %s1778 = scalar_lea.vmem %s1759, %s1776 [#allocation2]
                  %s1779 = scalar_lea.vmem %s1761, %s1777
                $region94: #{flowgnn_conv_block.2} parent=81 // loop_footer
                  %s1765 = sadd.s32 %s1763, 1
                $region95: #{flowgnn_conv_block.2} parent=81 // loop_footer_branch
                  %1762 = sbr.rel target = $region91
                $region96: #{flowgnn_conv_block.2} parent=81 // loop_exit
                  _
              $region82: #{flowgnn_conv_block.2} parent=59 // pred_fallthru
                _
              // Predicated region
              $region97: #{flowgnn_conv_block.2} parent=59 // pred_check
                _
              $region98: #{flowgnn_conv_block.2} parent=59 // pred_check_branch
                %1781 = sbr.rel target = $region100
              $region99: #{flowgnn_conv_block.2} parent=59 // pred_region
                _
              $region100: #{flowgnn_conv_block.2} parent=59 // pred_fallthru
                _
            $region60: #{flowgnn_conv_block.2} parent=55 // pred_fallthru
              _
            // Predicated region
            $region61: #{flowgnn_conv_block.2} parent=55 // pred_check
              _
            $region62: #{flowgnn_conv_block.2} parent=55 // pred_check_branch
              %1537 = sbr.rel target = $region64
            $region63: #{flowgnn_conv_block.2} parent=55 // pred_region
              %s1539 = ssub.s32 256, 1
              %s1540 = sdiv.u32.pop %s1526, 38
              %s1541 = srem.u32.pop %s1526, 38
              // While loop
              $region65: #{flowgnn_conv_block.2} parent=63 // loop_pre_header
                _
              $region66: #{flowgnn_conv_block.2} parent=63 // loop_header
                %s1543 = sphi 0, %s1545
                %p1544 = scmp.ge.s32.totalorder %s1543, %s1540
                %s1548 = sphi 0, %s1629
                %s1549 = sphi %s1519, %s1632
                %s1550 = sphi %s1530, %s1633
              $region67: #{flowgnn_conv_block.2} parent=63 // loop_header_branch
                %1547 = sbr.rel (%p1544) target = $region71
              $region68: #{flowgnn_conv_block.2} parent=63 // loop_body
                %v1551 = vld [vmem:[%s1549] sm:%s1539]
                %1552 = vst [vmem:[%s1550] sm:%s1539] %v1551
                %v1553 = vld [vmem:[%s1549 + $0x8] sm:%s1539]
                %1554 = vst [vmem:[%s1550 + $0x8] sm:%s1539] %v1553
                %v1555 = vld [vmem:[%s1549 + $0x10] sm:%s1539]
                %1556 = vst [vmem:[%s1550 + $0x10] sm:%s1539] %v1555
                %v1557 = vld [vmem:[%s1549 + $0x18] sm:%s1539]
                %1558 = vst [vmem:[%s1550 + $0x18] sm:%s1539] %v1557
                %v1559 = vld [vmem:[%s1549 + $0x20] sm:%s1539]
                %1560 = vst [vmem:[%s1550 + $0x20] sm:%s1539] %v1559
                %v1561 = vld [vmem:[%s1549 + $0x28] sm:%s1539]
                %1562 = vst [vmem:[%s1550 + $0x28] sm:%s1539] %v1561
                %v1563 = vld [vmem:[%s1549 + $0x30] sm:%s1539]
                %1564 = vst [vmem:[%s1550 + $0x30] sm:%s1539] %v1563
                %v1565 = vld [vmem:[%s1549 + $0x38] sm:%s1539]
                %1566 = vst [vmem:[%s1550 + $0x38] sm:%s1539] %v1565
                %v1567 = vld [vmem:[%s1549 + $0x40] sm:%s1539]
                %1568 = vst [vmem:[%s1550 + $0x40] sm:%s1539] %v1567
                %v1569 = vld [vmem:[%s1549 + $0x48] sm:%s1539]
                %1570 = vst [vmem:[%s1550 + $0x48] sm:%s1539] %v1569
                %v1571 = vld [vmem:[%s1549 + $0x50] sm:%s1539]
                %1572 = vst [vmem:[%s1550 + $0x50] sm:%s1539] %v1571
                %v1573 = vld [vmem:[%s1549 + $0x58] sm:%s1539]
                %1574 = vst [vmem:[%s1550 + $0x58] sm:%s1539] %v1573
                %v1575 = vld [vmem:[%s1549 + $0x60] sm:%s1539]
                %1576 = vst [vmem:[%s1550 + $0x60] sm:%s1539] %v1575
                %v1577 = vld [vmem:[%s1549 + $0x68] sm:%s1539]
                %1578 = vst [vmem:[%s1550 + $0x68] sm:%s1539] %v1577
                %v1579 = vld [vmem:[%s1549 + $0x70] sm:%s1539]
                %1580 = vst [vmem:[%s1550 + $0x70] sm:%s1539] %v1579
                %v1581 = vld [vmem:[%s1549 + $0x78] sm:%s1539]
                %1582 = vst [vmem:[%s1550 + $0x78] sm:%s1539] %v1581
                %v1583 = vld [vmem:[%s1549 + $0x80] sm:%s1539]
                %1584 = vst [vmem:[%s1550 + $0x80] sm:%s1539] %v1583
                %v1585 = vld [vmem:[%s1549 + $0x88] sm:%s1539]
                %1586 = vst [vmem:[%s1550 + $0x88] sm:%s1539] %v1585
                %v1587 = vld [vmem:[%s1549 + $0x90] sm:%s1539]
                %1588 = vst [vmem:[%s1550 + $0x90] sm:%s1539] %v1587
                %v1589 = vld [vmem:[%s1549 + $0x98] sm:%s1539]
                %1590 = vst [vmem:[%s1550 + $0x98] sm:%s1539] %v1589
                %v1591 = vld [vmem:[%s1549 + $0xa0] sm:%s1539]
                %1592 = vst [vmem:[%s1550 + $0xa0] sm:%s1539] %v1591
                %v1593 = vld [vmem:[%s1549 + $0xa8] sm:%s1539]
                %1594 = vst [vmem:[%s1550 + $0xa8] sm:%s1539] %v1593
                %v1595 = vld [vmem:[%s1549 + $0xb0] sm:%s1539]
                %1596 = vst [vmem:[%s1550 + $0xb0] sm:%s1539] %v1595
                %v1597 = vld [vmem:[%s1549 + $0xb8] sm:%s1539]
                %1598 = vst [vmem:[%s1550 + $0xb8] sm:%s1539] %v1597
                %v1599 = vld [vmem:[%s1549 + $0xc0] sm:%s1539]
                %1600 = vst [vmem:[%s1550 + $0xc0] sm:%s1539] %v1599
                %v1601 = vld [vmem:[%s1549 + $0xc8] sm:%s1539]
                %1602 = vst [vmem:[%s1550 + $0xc8] sm:%s1539] %v1601
                %v1603 = vld [vmem:[%s1549 + $0xd0] sm:%s1539]
                %1604 = vst [vmem:[%s1550 + $0xd0] sm:%s1539] %v1603
                %v1605 = vld [vmem:[%s1549 + $0xd8] sm:%s1539]
                %1606 = vst [vmem:[%s1550 + $0xd8] sm:%s1539] %v1605
                %v1607 = vld [vmem:[%s1549 + $0xe0] sm:%s1539]
                %1608 = vst [vmem:[%s1550 + $0xe0] sm:%s1539] %v1607
                %v1609 = vld [vmem:[%s1549 + $0xe8] sm:%s1539]
                %1610 = vst [vmem:[%s1550 + $0xe8] sm:%s1539] %v1609
                %v1611 = vld [vmem:[%s1549 + $0xf0] sm:%s1539]
                %1612 = vst [vmem:[%s1550 + $0xf0] sm:%s1539] %v1611
                %v1613 = vld [vmem:[%s1549 + $0xf8] sm:%s1539]
                %1614 = vst [vmem:[%s1550 + $0xf8] sm:%s1539] %v1613
                %v1615 = vld [vmem:[%s1549 + $0x100] sm:%s1539]
                %1616 = vst [vmem:[%s1550 + $0x100] sm:%s1539] %v1615
                %v1617 = vld [vmem:[%s1549 + $0x108] sm:%s1539]
                %1618 = vst [vmem:[%s1550 + $0x108] sm:%s1539] %v1617
                %v1619 = vld [vmem:[%s1549 + $0x110] sm:%s1539]
                %1620 = vst [vmem:[%s1550 + $0x110] sm:%s1539] %v1619
                %v1621 = vld [vmem:[%s1549 + $0x118] sm:%s1539]
                %1622 = vst [vmem:[%s1550 + $0x118] sm:%s1539] %v1621
                %v1623 = vld [vmem:[%s1549 + $0x120] sm:%s1539]
                %1624 = vst [vmem:[%s1550 + $0x120] sm:%s1539] %v1623
                %v1625 = vld [vmem:[%s1549 + $0x128] sm:%s1539]
                %1626 = vst [vmem:[%s1550 + $0x128] sm:%s1539] %v1625
                %s1627 = sadd.s32 1, %s1548
                %p1628 = scmp.ge.s32.totalorder %s1627, %s1540
                %s1629 = scalar_select %p1628, 0, %s1627
                %s1630 = smul.u32 %s1629, 304
                %s1631 = smul.u32 %s1629, 304
                %s1632 = scalar_lea.vmem %s1519, %s1630 [#allocation2]
                %s1633 = scalar_lea.vmem %s1530, %s1631
              $region69: #{flowgnn_conv_block.2} parent=63 // loop_footer
                %s1545 = sadd.s32 %s1543, 1
              $region70: #{flowgnn_conv_block.2} parent=63 // loop_footer_branch
                %1542 = sbr.rel target = $region66
              $region71: #{flowgnn_conv_block.2} parent=63 // loop_exit
                _
              %s1634 = sdiv.u32.pop %s1526, 38
              %s1635 = srem.u32.pop %s1526, 38
              %s1636 = smul.u32 %s1634, 38
              %s1637 = smul.u32 8, %s1636
              %s1638 = scalar_lea.vmem %s1519, %s1637 [#allocation2]
              %s1639 = smul.u32 8, %s1636
              %s1640 = scalar_lea.vmem %s1530, %s1639
              // While loop
              $region72: #{flowgnn_conv_block.2} parent=63 // loop_pre_header
                _
              $region73: #{flowgnn_conv_block.2} parent=63 // loop_header
                %s1642 = sphi 0, %s1644
                %p1643 = scmp.ge.s32.totalorder %s1642, %s1635
                %s1647 = sphi 0, %s1654
                %s1648 = sphi %s1638, %s1657
                %s1649 = sphi %s1640, %s1658
              $region74: #{flowgnn_conv_block.2} parent=63 // loop_header_branch
                %1646 = sbr.rel (%p1643) target = $region78
              $region75: #{flowgnn_conv_block.2} parent=63 // loop_body
                %v1650 = vld [vmem:[%s1648] sm:%s1539]
                %1651 = vst [vmem:[%s1649] sm:%s1539] %v1650
                %s1652 = sadd.s32 1, %s1647
                %p1653 = scmp.ge.s32.totalorder %s1652, %s1635
                %s1654 = scalar_select %p1653, 0, %s1652
                %s1655 = smul.u32 %s1654, 8
                %s1656 = smul.u32 %s1654, 8
                %s1657 = scalar_lea.vmem %s1638, %s1655 [#allocation2]
                %s1658 = scalar_lea.vmem %s1640, %s1656
              $region76: #{flowgnn_conv_block.2} parent=63 // loop_footer
                %s1644 = sadd.s32 %s1642, 1
              $region77: #{flowgnn_conv_block.2} parent=63 // loop_footer_branch
                %1641 = sbr.rel target = $region73
              $region78: #{flowgnn_conv_block.2} parent=63 // loop_exit
                _
            $region64: #{flowgnn_conv_block.2} parent=55 // pred_fallthru
              _
          $region56: #{flowgnn_conv_block.2} parent=51 // pred_fallthru
            _
          %1782 = vnop
        $region52: #{flowgnn_conv_block.2} parent=47 // pred_fallthru
          _
      $region48: #{flowgnn_conv_block.2} parent=5 // pred_fallthru
        _
      %p1783 = scmp.le.s32.totalorder 2, %s13
      // Predicated region
      $region101: #{flowgnn_conv_block.2} parent=5 // pred_check
        %p1784 = pneg %p1783
      $region102: #{flowgnn_conv_block.2} parent=5 // pred_check_branch
        %1786 = sbr.rel (%p1784) target = $region104
      $region103: #{flowgnn_conv_block.2} parent=5 // pred_region
        %s1787 = ssub.s32 %s13, 2
        // Predicated region
        $region105: #{flowgnn_conv_block.2} parent=103 // pred_check
          %p1788 = pneg %p199
        $region106: #{flowgnn_conv_block.2} parent=103 // pred_check_branch
          %1790 = sbr.rel (%p1788) target = $region108
        $region107: #{flowgnn_conv_block.2} parent=103 // pred_region
          %s1791 = sand.u32 %s184, 1
          %s1792 = sand.u32 %s184, 1
          %s1793 = smul.addr %s1792, 304
          %s1794 = scalar_lea.vmem [#allocation2], %s1793
        $region108: #{flowgnn_conv_block.2} parent=103 // pred_fallthru
          _
      $region104: #{flowgnn_conv_block.2} parent=5 // pred_fallthru
        _
    $region6: #{flowgnn_conv_block.2} parent=1 // loop_footer
      %s17 = sadd.s32 1, %s13
    $region7: #{flowgnn_conv_block.2} parent=1 // loop_footer_branch
      %12 = sbr.rel target = $region3
    $region8: #{flowgnn_conv_block.2} parent=1 // loop_exit
      _

</llo_original>
